<compile_context>
chip_gen: v6e
topology: v6e:2x2x1
jax: 0.10.0
libtpu: 0.0.40
codegen_flags: <defaults>
</compile_context>

<pallas_src>
import math
import jax
import jax.numpy as jnp
from jax.experimental import pallas as pl
from jax.experimental.pallas import tpu as pltpu

L = 8      # sequence length hard-coded by the module (view(1, 8, 1))
HID = 32   # Mlp mlp_dim
BB = 256   # samples (lanes) per grid step: 2x128 lanes, fills the MXU N dim


# ---------------------------------------------------------------------------
# in-kernel helpers (elementwise only: VPU / EUP)
# ---------------------------------------------------------------------------
def _erf_approx(x):
    # Abramowitz & Stegun 7.1.26, |err| <= 1.5e-7 ; uses only exp / div.
    a1, a2, a3, a4, a5 = 0.254829592, -0.284496736, 1.421413741, -1.453152027, 1.061405429
    p = 0.3275911
    sgn = jnp.where(x >= 0.0, 1.0, -1.0)
    ax = jnp.abs(x)
    t = 1.0 / (1.0 + p * ax)
    poly = ((((a5 * t + a4) * t + a3) * t + a2) * t + a1) * t
    return sgn * (1.0 - poly * jnp.exp(-ax * ax))


def _gelu_exact(x):
    return 0.5 * x * (1.0 + _erf_approx(x * 0.7071067811865476))


def _f32_matmul_mxu(a, b):
    """a @ b on the MXU with ~f32 accuracy via a bf16 hi/lo split (3 passes).

    Keeps the MLP contractions on the otherwise-idle MXU slot (review item)
    without betting the correctness check on the default f32 matmul precision;
    bf16 products are exact in the f32 accumulator, rel err ~1e-5."""
    a_hi = a.astype(jnp.bfloat16)
    a_lo = (a - a_hi.astype(jnp.float32)).astype(jnp.bfloat16)
    b_hi = b.astype(jnp.bfloat16)
    b_lo = (b - b_hi.astype(jnp.float32)).astype(jnp.bfloat16)
    dot = lambda u, v: jnp.dot(u, v, preferred_element_type=jnp.float32)
    return dot(a_hi, b_hi) + dot(a_hi, b_lo) + dot(a_lo, b_hi)


# ---------------------------------------------------------------------------
# constant-slab layout (one (64,128) f32 tile, 32 KiB), DMA'd to VMEM once:
#   [ 0:32,  0: 8]  mlp1.fc1.weight  (32, 8)  } stacked fc1          W1 (64, 8)
#   [32:64,  0: 8]  mlp2.fc1.weight  (32, 8)  }
#   [ 0: 8,  8:40]  mlp1.fc2.weight  ( 8,32)  } block-diagonal fc2   W2 (16,64)
#   [ 8:16, 40:72]  mlp2.fc2.weight  ( 8,32)  }
#   [ 0:64, 72:73]  stacked fc1 bias (64, 1)
#   [ 0:16, 73:74]  stacked fc2 bias (16, 1)
# The eight Conv1d(1,1,1) scalars travel separately in SMEM.
# ---------------------------------------------------------------------------
def _pack_constants(p):
    w = jnp.zeros((64, 128), jnp.float32)
    w = w.at[0:32, 0:8].set(p["m1_w1"].astype(jnp.float32))
    w = w.at[32:64, 0:8].set(p["m2_w1"].astype(jnp.float32))
    w = w.at[0:8, 8:40].set(p["m1_w2"].astype(jnp.float32))
    w = w.at[8:16, 40:72].set(p["m2_w2"].astype(jnp.float32))
    w = w.at[0:32, 72].set(p["m1_b1"].astype(jnp.float32))
    w = w.at[32:64, 72].set(p["m2_b1"].astype(jnp.float32))
    w = w.at[0:8, 73].set(p["m1_b2"].astype(jnp.float32))
    w = w.at[8:16, 73].set(p["m2_b2"].astype(jnp.float32))
    return w


def _pack_conv_scalars(p):
    return jnp.stack([p["c1_w"], p["c1_b"], p["c2_w"], p["c2_b"],
                      p["g1_w"], p["g1_b"], p["g2_w"], p["g2_b"]]).astype(jnp.float32)


# ---------------------------------------------------------------------------
# Pallas kernel: BB samples per grid step, fully vectorized over lanes
# ---------------------------------------------------------------------------
def _clngcn_kernel(conv_ref,   # (8,)     f32 SMEM: [c1_w,c1_b,c2_w,c2_b,g1_w,g1_b,g2_w,g2_b]
                   w_ref,      # (64,128) f32 VMEM constant slab (grid-invariant)
                   x_ref,      # (8, BB)  f32 cli: feature j on sublanes, sample on lanes
                   out_ref):   # (8, BB)  f32 x_gcn, same layout (lane-dense stores)
    c1_w, c1_b = conv_ref[0], conv_ref[1]
    c2_w, c2_b = conv_ref[2], conv_ref[3]
    g1_w, g1_b = conv_ref[4], conv_ref[5]
    g2_w, g2_b = conv_ref[6], conv_ref[7]

    w1 = w_ref[:, 0:8]        # (64, 8)   stacked fc1 weights
    w2 = w_ref[0:16, 8:72]    # (16, 64)  block-diagonal fc2 weights
    b1 = w_ref[:, 72:73]      # (64, 1)
    b2 = w_ref[0:16, 73:74]   # (16, 1)

    x = x_ref[...]            # (8, BB)

    # ---- both Mlps in one shot on the MXU (Dropout(0.3) = eval identity) ----
    h = _gelu_exact(_f32_matmul_mxu(w1, x) + b1)          # (64, BB)
    cm = _f32_matmul_mxu(w2, h) + b2                      # (16, BB)
    c = cm[0:8, :]            # c_j : mlp1 output ("cli_ss" row factor)
    # rows 8:16 of cm hold m_i : mlp2 output ("cli_mm" column factor)

    # ---- 1x1 convs are per-sample scalar affines ----
    sigma = c1_w * x + c1_b                               # sigma_j      (8,BB)
    alpha = c2_w * x + c2_b                               # alpha_j      (8,BB)
    r = jnp.maximum(g1_w * x + g1_b, 0.0)                 # GCN seg      (8,BB)

    # similarity[i,j] = m_i*ca*alpha_j + m_i*c_j*sigma_i*sigma_j,
    # ca = sum_j c_j*alpha_j.  The ONLY cross-sublane (XLU) reduce per block:
    ca = jnp.sum(c * alpha, axis=0, keepdims=True)        # (1, BB)
    t_a = ca * alpha                                      # ca*alpha_j   (8,BB)
    t_s = c * sigma                                       # c_j*sigma_j  (8,BB)

    # ---- softmax over i (torch Softmax(dim=1)) + GCN bmm, i unrolled (8) ----
    # Reductions over i are elementwise combines of eight (8,BB) values on the
    # VPU; per-i scalars come from (1,BB) row slices broadcast over j sublanes.
    sims = []
    mx = None
    for i in range(L):
        x_i = x[i:i + 1, :]                               # (1, BB)
        m_i = cm[8 + i:9 + i, :]                          # (1, BB)
        sig_i = c1_w * x_i + c1_b
        s_i = m_i * (t_a + t_s * sig_i)                   # (8, BB), index j
        sims.append(s_i)
        mx = s_i if mx is None else jnp.maximum(mx, s_i)

    denom = jnp.zeros_like(mx)
    numer = jnp.zeros_like(mx)
    for i in range(L):
        x_i = x[i:i + 1, :]
        r_i = jnp.maximum(g1_w * x_i + g1_b, 0.0)         # (1, BB)
        e_i = jnp.exp(sims[i] - mx)                       # (8, BB)
        denom = denom + e_i
        numer = numer + r_i * e_i                         # sum_i r_i * exp(.)

    # softmax divide on the EUP: approx reciprocal + one Newton step (~1e-7).
    inv = pl.reciprocal(denom, approx=True)
    inv = inv * (2.0 - denom * inv)
    seg_sim = numer * inv                                 # (r @ softmax(sim))_j

    # GCN tail: relu(conv2(seg @ sim)) + seg
    out_ref[...] = jnp.maximum(g2_w * seg_sim + g2_b, 0.0) + r


# ---------------------------------------------------------------------------
# wrapper: batch-in-lanes relayout, >=2 parallel grid steps, lane-dense output
# ---------------------------------------------------------------------------
def clngcn_forward(cli, p):
    """cli: (B, 1, 8) f32 — B independent samples, each identical to the
    PyTorch module's (1, 1, 8) input.  Returns (B, 8) = x_gcn per sample."""
    cli = jnp.asarray(cli, jnp.float32)
    B = cli.shape[0]

    # Pad the batch so the grid always has >= 2 parallel steps (v7x megacore);
    # padded lanes are zeros and stay finite through the whole kernel.
    nblk = max(2, -(-B // BB))
    Bp = nblk * BB
    x_slab = jnp.zeros((L, Bp), jnp.float32).at[:, :B].set(cli.reshape(B, L).T)

    conv = _pack_conv_scalars(p)                 # (8,)      -> SMEM
    wslab = _pack_constants(p)                   # (64, 128) -> VMEM, copied once

    out = pl.pallas_call(
        _clngcn_kernel,
        out_shape=jax.ShapeDtypeStruct((L, Bp), jnp.float32),
        grid=(nblk,),
        in_specs=[
            pl.BlockSpec(memory_space=pltpu.MemorySpace.SMEM),   # conv scalars
            pl.BlockSpec((64, 128), lambda g: (0, 0)),           # constant slab
            pl.BlockSpec((L, BB), lambda g: (0, g)),             # cli slab
        ],
        out_specs=pl.BlockSpec((L, BB), lambda g: (0, g)),
        compiler_params=pltpu.CompilerParams(
            dimension_semantics=("parallel",)),
    )(conv, wslab, x_slab)

    return out[:, :B].T                          # back to (B, 8)


# ---------------------------------------------------------------------------
# pure-JAX reference (correctness check) + deterministic param init
# ---------------------------------------------------------------------------
def ref_forward(cli, p):
    """cli: (B,1,8) -> (B,8); per-sample mirror of the PyTorch module."""
    def one(xrow):
        x = xrow[None, :]                                     # (1,8)
        sigma = p["c1_w"] * x + p["c1_b"]
        alpha = p["c2_w"] * x + p["c2_b"]

        def mlp(xx, w1, b1, w2, b2):
            h = jax.nn.gelu(xx @ w1.T + b1, approximate=False)
            return h @ w2.T + b2

        c = mlp(x, p["m1_w1"], p["m1_b1"], p["m1_w2"], p["m1_b2"])
        m = mlp(x, p["m2_w1"], p["m2_b1"], p["m2_w2"], p["m2_b2"])
        sigma_out = sigma.T @ sigma
        diag_cha = m.T @ c
        sim = (diag_cha @ alpha.T) @ alpha + diag_cha * sigma_out
        sim = jax.nn.softmax(sim, axis=0)                     # torch Softmax(dim=1)
        r = jax.nn.relu(p["g1_w"] * x + p["g1_b"])
        out = jax.nn.relu(p["g2_w"] * (r @ sim) + p["g2_b"]) + r
        return out[0]

    return jax.vmap(one)(jnp.asarray(cli, jnp.float32).reshape(-1, L))


def init_params(key):
    ks = jax.random.split(key, 16)

    def xavier(k, shape):  # (out, in)
        fo, fi = shape
        lim = math.sqrt(6.0 / (fi + fo))
        return jax.random.uniform(k, shape, jnp.float32, -lim, lim)

    def conv_scalar(k):  # Conv1d(1,1,1) default init: U(-1, 1) (fan_in = 1)
        return jax.random.uniform(k, (), jnp.float32, -1.0, 1.0)

    return {
        "c1_w": conv_scalar(ks[0]), "c1_b": conv_scalar(ks[1]),
        "c2_w": conv_scalar(ks[2]), "c2_b": conv_scalar(ks[3]),
        "g1_w": conv_scalar(ks[4]), "g1_b": conv_scalar(ks[5]),
        "g2_w": conv_scalar(ks[6]), "g2_b": conv_scalar(ks[7]),
        "m1_w1": xavier(ks[8], (HID, L)),
        "m1_b1": jax.random.normal(ks[9], (HID,), jnp.float32) * 1e-6,
        "m1_w2": xavier(ks[10], (L, HID)),
        "m1_b2": jax.random.normal(ks[11], (L,), jnp.float32) * 1e-6,
        "m2_w1": xavier(ks[12], (HID, L)),
        "m2_b1": jax.random.normal(ks[13], (HID,), jnp.float32) * 1e-6,
        "m2_w2": xavier(ks[14], (L, HID)),
        "m2_b2": jax.random.normal(ks[15], (L,), jnp.float32) * 1e-6,
    }


if __name__ == "__main__":
    key = jax.random.PRNGKey(0)
    k_in, k_par = jax.random.split(key)
    params = init_params(k_par)

    # Tolerance note: the MXU bf16-split matmul (~1e-5 rel err on c/m) is
    # amplified by the exp/softmax to ~1e-4-level output error, hence
    # atol=1e-3 (v2 used exact VPU contractions and 1e-4).
    ATOL, RTOL = 1e-3, 1e-3

    # batched call: 16 independent samples (padded to 2 parallel grid steps)
    B = 16
    cli_batch = jax.random.normal(k_in, (B, 1, L), jnp.float32)
    out = jax.block_until_ready(clngcn_forward(cli_batch, params))
    assert out.shape == (B, L), out.shape
    ref = ref_forward(cli_batch, params)
    if not jnp.allclose(out, ref, atol=ATOL, rtol=RTOL):
        err = jnp.max(jnp.abs(out - ref))
        raise AssertionError(f"batched kernel/ref mismatch (max abs err {err}):\n{out}\n{ref}")

    # module-exact single-sample path: cli is (1, 1, 8) like the PyTorch module
    cli_one = cli_batch[:1]
    out1 = jax.block_until_ready(clngcn_forward(cli_one, params))
    assert out1.shape == (1, L), out1.shape
    ref1 = ref_forward(cli_one, params)
    if not jnp.allclose(out1, ref1, atol=ATOL, rtol=RTOL):
        err1 = jnp.max(jnp.abs(out1 - ref1))
        raise AssertionError(f"single-sample kernel/ref mismatch (max abs err {err1}):\n{out1}\n{ref1}")

    print("KERNEL_OK")
</pallas_src>

<mosaic_0001>
module attributes {stable_mosaic.version = 11 : i64} {
  func.func @_clngcn_kernel(%arg0: i32, %arg1: memref<8xf32, #tpu.memory_space<smem>>, %arg2: memref<64x128xf32, #tpu.memory_space<vmem>>, %arg3: memref<8x256xf32, #tpu.memory_space<vmem>>, %arg4: memref<8x256xf32, #tpu.memory_space<vmem>>) attributes {dimension_semantics = [#tpu.dimension_semantics<parallel>], iteration_bounds = array<i64: 2>, scalar_prefetch = 0 : i64, scratch_operands = 0 : i64, tpu.core_type = #tpu.core_type<tc>, window_params = [{transform_indices = @transform_0, window_bounds = array<i64: 8>}, {pipeline_mode = #tpu.pipeline_mode<synchronous>, transform_indices = @transform_1, window_bounds = array<i64: 64, 128>}, {transform_indices = @transform_2, window_bounds = array<i64: 8, 256>}, {transform_indices = @transform_3, window_bounds = array<i64: 8, 256>}]} {
    %c0 = arith.constant 0 : index
    %0 = memref.load %arg1[%c0] : memref<8xf32, #tpu.memory_space<smem>>
    %c1 = arith.constant 1 : index
    %1 = memref.load %arg1[%c1] : memref<8xf32, #tpu.memory_space<smem>>
    %c2 = arith.constant 2 : index
    %2 = memref.load %arg1[%c2] : memref<8xf32, #tpu.memory_space<smem>>
    %c3 = arith.constant 3 : index
    %3 = memref.load %arg1[%c3] : memref<8xf32, #tpu.memory_space<smem>>
    %c4 = arith.constant 4 : index
    %4 = memref.load %arg1[%c4] : memref<8xf32, #tpu.memory_space<smem>>
    %c5 = arith.constant 5 : index
    %5 = memref.load %arg1[%c5] : memref<8xf32, #tpu.memory_space<smem>>
    %c6 = arith.constant 6 : index
    %6 = memref.load %arg1[%c6] : memref<8xf32, #tpu.memory_space<smem>>
    %c7 = arith.constant 7 : index
    %7 = memref.load %arg1[%c7] : memref<8xf32, #tpu.memory_space<smem>>
    %c0_0 = arith.constant 0 : index
    %c0_1 = arith.constant 0 : index
    %8 = vector.load %arg2[%c0_0, %c0_1] : memref<64x128xf32, #tpu.memory_space<vmem>>, vector<64x8xf32>
    %c0_2 = arith.constant 0 : index
    %c8 = arith.constant 8 : index
    %9 = vector.load %arg2[%c0_2, %c8] : memref<64x128xf32, #tpu.memory_space<vmem>>, vector<16x64xf32>
    %c0_3 = arith.constant 0 : index
    %c72 = arith.constant 72 : index
    %10 = vector.load %arg2[%c0_3, %c72] : memref<64x128xf32, #tpu.memory_space<vmem>>, vector<64x1xf32>
    %c0_4 = arith.constant 0 : index
    %c73 = arith.constant 73 : index
    %11 = vector.load %arg2[%c0_4, %c73] : memref<64x128xf32, #tpu.memory_space<vmem>>, vector<16x1xf32>
    %c0_5 = arith.constant 0 : index
    %c0_6 = arith.constant 0 : index
    %12 = vector.load %arg3[%c0_5, %c0_6] : memref<8x256xf32, #tpu.memory_space<vmem>>, vector<8x256xf32>
    %13 = arith.truncf %8 : vector<64x8xf32> to vector<64x8xbf16>
    %14 = arith.extf %13 : vector<64x8xbf16> to vector<64x8xf32>
    %15 = arith.subf %8, %14 : vector<64x8xf32>
    %16 = arith.truncf %15 : vector<64x8xf32> to vector<64x8xbf16>
    %17 = arith.truncf %12 : vector<8x256xf32> to vector<8x256xbf16>
    %18 = arith.extf %17 : vector<8x256xbf16> to vector<8x256xf32>
    %19 = arith.subf %12, %18 : vector<8x256xf32>
    %20 = arith.truncf %19 : vector<8x256xf32> to vector<8x256xbf16>
    %cst = arith.constant dense<0.000000e+00> : vector<64x256xf32>
    %21 = tpu.matmul %13, %17, %cst {dimension_numbers = #tpu.dot_dimension_numbers<[1], [0], [0], [1], [0, 0, 1, 1], [], []>} : vector<64x8xbf16>, vector<8x256xbf16>, vector<64x256xf32> -> vector<64x256xf32>
    %cst_7 = arith.constant dense<0.000000e+00> : vector<64x256xf32>
    %22 = tpu.matmul %13, %20, %cst_7 {dimension_numbers = #tpu.dot_dimension_numbers<[1], [0], [0], [1], [0, 0, 1, 1], [], []>} : vector<64x8xbf16>, vector<8x256xbf16>, vector<64x256xf32> -> vector<64x256xf32>
    %23 = arith.addf %21, %22 : vector<64x256xf32>
    %cst_8 = arith.constant dense<0.000000e+00> : vector<64x256xf32>
    %24 = tpu.matmul %16, %17, %cst_8 {dimension_numbers = #tpu.dot_dimension_numbers<[1], [0], [0], [1], [0, 0, 1, 1], [], []>} : vector<64x8xbf16>, vector<8x256xbf16>, vector<64x256xf32> -> vector<64x256xf32>
    %25 = arith.addf %23, %24 : vector<64x256xf32>
    %26 = vector.broadcast %10 : vector<64x1xf32> to vector<64x256xf32>
    %27 = arith.addf %25, %26 : vector<64x256xf32>
    %cst_9 = arith.constant 5.000000e-01 : f32
    %28 = vector.broadcast %cst_9 : f32 to vector<64x256xf32>
    %29 = arith.mulf %28, %27 : vector<64x256xf32>
    %cst_10 = arith.constant 0.707106769 : f32
    %30 = vector.broadcast %cst_10 : f32 to vector<64x256xf32>
    %31 = arith.mulf %27, %30 : vector<64x256xf32>
    %cst_11 = arith.constant 0.000000e+00 : f32
    %32 = vector.broadcast %cst_11 : f32 to vector<64x256xf32>
    %33 = arith.cmpf oge, %31, %32 : vector<64x256xf32>
    %cst_12 = arith.constant 1.000000e+00 : f32
    %cst_13 = arith.constant -1.000000e+00 : f32
    %34 = vector.broadcast %cst_12 : f32 to vector<64x256xf32>
    %35 = vector.broadcast %cst_13 : f32 to vector<64x256xf32>
    %36 = arith.select %33, %34, %35 : vector<64x256xi1>, vector<64x256xf32>
    %37 = math.absf %31 : vector<64x256xf32>
    %cst_14 = arith.constant 0.327591091 : f32
    %38 = vector.broadcast %cst_14 : f32 to vector<64x256xf32>
    %39 = arith.mulf %38, %37 : vector<64x256xf32>
    %cst_15 = arith.constant 1.000000e+00 : f32
    %40 = vector.broadcast %cst_15 : f32 to vector<64x256xf32>
    %41 = arith.addf %40, %39 : vector<64x256xf32>
    %cst_16 = arith.constant 1.000000e+00 : f32
    %42 = vector.broadcast %cst_16 : f32 to vector<64x256xf32>
    %43 = arith.divf %42, %41 : vector<64x256xf32>
    %cst_17 = arith.constant 1.06140542 : f32
    %44 = vector.broadcast %cst_17 : f32 to vector<64x256xf32>
    %45 = arith.mulf %44, %43 : vector<64x256xf32>
    %cst_18 = arith.constant -1.45315206 : f32
    %46 = vector.broadcast %cst_18 : f32 to vector<64x256xf32>
    %47 = arith.addf %45, %46 : vector<64x256xf32>
    %48 = arith.mulf %47, %43 : vector<64x256xf32>
    %cst_19 = arith.constant 1.42141378 : f32
    %49 = vector.broadcast %cst_19 : f32 to vector<64x256xf32>
    %50 = arith.addf %48, %49 : vector<64x256xf32>
    %51 = arith.mulf %50, %43 : vector<64x256xf32>
    %cst_20 = arith.constant -0.284496725 : f32
    %52 = vector.broadcast %cst_20 : f32 to vector<64x256xf32>
    %53 = arith.addf %51, %52 : vector<64x256xf32>
    %54 = arith.mulf %53, %43 : vector<64x256xf32>
    %cst_21 = arith.constant 0.254829586 : f32
    %55 = vector.broadcast %cst_21 : f32 to vector<64x256xf32>
    %56 = arith.addf %54, %55 : vector<64x256xf32>
    %57 = arith.mulf %56, %43 : vector<64x256xf32>
    %cst_22 = arith.constant 0.000000e+00 : f32
    %58 = vector.broadcast %cst_22 : f32 to vector<64x256xf32>
    %59 = arith.subf %58, %37 : vector<64x256xf32>
    %60 = arith.mulf %59, %37 : vector<64x256xf32>
    %61 = math.exp %60 : vector<64x256xf32>
    %62 = arith.mulf %57, %61 : vector<64x256xf32>
    %cst_23 = arith.constant 1.000000e+00 : f32
    %63 = vector.broadcast %cst_23 : f32 to vector<64x256xf32>
    %64 = arith.subf %63, %62 : vector<64x256xf32>
    %65 = arith.mulf %36, %64 : vector<64x256xf32>
    %cst_24 = arith.constant 1.000000e+00 : f32
    %66 = vector.broadcast %cst_24 : f32 to vector<64x256xf32>
    %67 = arith.addf %66, %65 : vector<64x256xf32>
    %68 = arith.mulf %29, %67 : vector<64x256xf32>
    %69 = arith.truncf %9 : vector<16x64xf32> to vector<16x64xbf16>
    %70 = arith.extf %69 : vector<16x64xbf16> to vector<16x64xf32>
    %71 = arith.subf %9, %70 : vector<16x64xf32>
    %72 = arith.truncf %71 : vector<16x64xf32> to vector<16x64xbf16>
    %73 = arith.truncf %68 : vector<64x256xf32> to vector<64x256xbf16>
    %74 = arith.extf %73 : vector<64x256xbf16> to vector<64x256xf32>
    %75 = arith.subf %68, %74 : vector<64x256xf32>
    %76 = arith.truncf %75 : vector<64x256xf32> to vector<64x256xbf16>
    %cst_25 = arith.constant dense<0.000000e+00> : vector<16x256xf32>
    %77 = tpu.matmul %69, %73, %cst_25 {dimension_numbers = #tpu.dot_dimension_numbers<[1], [0], [0], [1], [0, 0, 1, 1], [], []>} : vector<16x64xbf16>, vector<64x256xbf16>, vector<16x256xf32> -> vector<16x256xf32>
    %cst_26 = arith.constant dense<0.000000e+00> : vector<16x256xf32>
    %78 = tpu.matmul %69, %76, %cst_26 {dimension_numbers = #tpu.dot_dimension_numbers<[1], [0], [0], [1], [0, 0, 1, 1], [], []>} : vector<16x64xbf16>, vector<64x256xbf16>, vector<16x256xf32> -> vector<16x256xf32>
    %79 = arith.addf %77, %78 : vector<16x256xf32>
    %cst_27 = arith.constant dense<0.000000e+00> : vector<16x256xf32>
    %80 = tpu.matmul %72, %73, %cst_27 {dimension_numbers = #tpu.dot_dimension_numbers<[1], [0], [0], [1], [0, 0, 1, 1], [], []>} : vector<16x64xbf16>, vector<64x256xbf16>, vector<16x256xf32> -> vector<16x256xf32>
    %81 = arith.addf %79, %80 : vector<16x256xf32>
    %82 = vector.broadcast %11 : vector<16x1xf32> to vector<16x256xf32>
    %83 = arith.addf %81, %82 : vector<16x256xf32>
    %84 = vector.extract_strided_slice %83 {offsets = [0, 0], sizes = [8, 256], strides = [1, 1]} : vector<16x256xf32> to vector<8x256xf32>
    %85 = vector.broadcast %0 : f32 to vector<8x256xf32>
    %86 = arith.mulf %85, %12 : vector<8x256xf32>
    %87 = vector.broadcast %1 : f32 to vector<8x256xf32>
    %88 = arith.addf %86, %87 : vector<8x256xf32>
    %89 = vector.broadcast %2 : f32 to vector<8x256xf32>
    %90 = arith.mulf %89, %12 : vector<8x256xf32>
    %91 = vector.broadcast %3 : f32 to vector<8x256xf32>
    %92 = arith.addf %90, %91 : vector<8x256xf32>
    %93 = vector.broadcast %4 : f32 to vector<8x256xf32>
    %94 = arith.mulf %93, %12 : vector<8x256xf32>
    %95 = vector.broadcast %5 : f32 to vector<8x256xf32>
    %96 = arith.addf %94, %95 : vector<8x256xf32>
    %cst_28 = arith.constant 0.000000e+00 : f32
    %97 = vector.broadcast %cst_28 : f32 to vector<8x256xf32>
    %98 = arith.maximumf %96, %97 : vector<8x256xf32>
    %99 = arith.mulf %84, %92 : vector<8x256xf32>
    %cst_29 = arith.constant dense<0.000000e+00> : vector<256xf32>
    %100 = vector.multi_reduction <add>, %99, %cst_29 [0] : vector<8x256xf32> to vector<256xf32>
    %101 = vector.shape_cast %100 : vector<256xf32> to vector<1x256xf32>
    %102 = vector.broadcast %101 : vector<1x256xf32> to vector<8x256xf32>
    %103 = arith.mulf %102, %92 : vector<8x256xf32>
    %104 = arith.mulf %84, %88 : vector<8x256xf32>
    %105 = vector.extract_strided_slice %12 {offsets = [0, 0], sizes = [1, 256], strides = [1, 1]} : vector<8x256xf32> to vector<1x256xf32>
    %106 = vector.extract_strided_slice %83 {offsets = [8, 0], sizes = [1, 256], strides = [1, 1]} : vector<16x256xf32> to vector<1x256xf32>
    %107 = vector.broadcast %0 : f32 to vector<1x256xf32>
    %108 = arith.mulf %107, %105 : vector<1x256xf32>
    %109 = vector.broadcast %1 : f32 to vector<1x256xf32>
    %110 = arith.addf %108, %109 : vector<1x256xf32>
    %111 = vector.broadcast %110 : vector<1x256xf32> to vector<8x256xf32>
    %112 = arith.mulf %104, %111 : vector<8x256xf32>
    %113 = arith.addf %103, %112 : vector<8x256xf32>
    %114 = vector.broadcast %106 : vector<1x256xf32> to vector<8x256xf32>
    %115 = arith.mulf %114, %113 : vector<8x256xf32>
    %116 = vector.extract_strided_slice %12 {offsets = [1, 0], sizes = [1, 256], strides = [1, 1]} : vector<8x256xf32> to vector<1x256xf32>
    %117 = vector.extract_strided_slice %83 {offsets = [9, 0], sizes = [1, 256], strides = [1, 1]} : vector<16x256xf32> to vector<1x256xf32>
    %118 = vector.broadcast %0 : f32 to vector<1x256xf32>
    %119 = arith.mulf %118, %116 : vector<1x256xf32>
    %120 = vector.broadcast %1 : f32 to vector<1x256xf32>
    %121 = arith.addf %119, %120 : vector<1x256xf32>
    %122 = vector.broadcast %121 : vector<1x256xf32> to vector<8x256xf32>
    %123 = arith.mulf %104, %122 : vector<8x256xf32>
    %124 = arith.addf %103, %123 : vector<8x256xf32>
    %125 = vector.broadcast %117 : vector<1x256xf32> to vector<8x256xf32>
    %126 = arith.mulf %125, %124 : vector<8x256xf32>
    %127 = arith.maximumf %115, %126 : vector<8x256xf32>
    %128 = vector.extract_strided_slice %12 {offsets = [2, 0], sizes = [1, 256], strides = [1, 1]} : vector<8x256xf32> to vector<1x256xf32>
    %129 = vector.extract_strided_slice %83 {offsets = [10, 0], sizes = [1, 256], strides = [1, 1]} : vector<16x256xf32> to vector<1x256xf32>
    %130 = vector.broadcast %0 : f32 to vector<1x256xf32>
    %131 = arith.mulf %130, %128 : vector<1x256xf32>
    %132 = vector.broadcast %1 : f32 to vector<1x256xf32>
    %133 = arith.addf %131, %132 : vector<1x256xf32>
    %134 = vector.broadcast %133 : vector<1x256xf32> to vector<8x256xf32>
    %135 = arith.mulf %104, %134 : vector<8x256xf32>
    %136 = arith.addf %103, %135 : vector<8x256xf32>
    %137 = vector.broadcast %129 : vector<1x256xf32> to vector<8x256xf32>
    %138 = arith.mulf %137, %136 : vector<8x256xf32>
    %139 = arith.maximumf %127, %138 : vector<8x256xf32>
    %140 = vector.extract_strided_slice %12 {offsets = [3, 0], sizes = [1, 256], strides = [1, 1]} : vector<8x256xf32> to vector<1x256xf32>
    %141 = vector.extract_strided_slice %83 {offsets = [11, 0], sizes = [1, 256], strides = [1, 1]} : vector<16x256xf32> to vector<1x256xf32>
    %142 = vector.broadcast %0 : f32 to vector<1x256xf32>
    %143 = arith.mulf %142, %140 : vector<1x256xf32>
    %144 = vector.broadcast %1 : f32 to vector<1x256xf32>
    %145 = arith.addf %143, %144 : vector<1x256xf32>
    %146 = vector.broadcast %145 : vector<1x256xf32> to vector<8x256xf32>
    %147 = arith.mulf %104, %146 : vector<8x256xf32>
    %148 = arith.addf %103, %147 : vector<8x256xf32>
    %149 = vector.broadcast %141 : vector<1x256xf32> to vector<8x256xf32>
    %150 = arith.mulf %149, %148 : vector<8x256xf32>
    %151 = arith.maximumf %139, %150 : vector<8x256xf32>
    %152 = vector.extract_strided_slice %12 {offsets = [4, 0], sizes = [1, 256], strides = [1, 1]} : vector<8x256xf32> to vector<1x256xf32>
    %153 = vector.extract_strided_slice %83 {offsets = [12, 0], sizes = [1, 256], strides = [1, 1]} : vector<16x256xf32> to vector<1x256xf32>
    %154 = vector.broadcast %0 : f32 to vector<1x256xf32>
    %155 = arith.mulf %154, %152 : vector<1x256xf32>
    %156 = vector.broadcast %1 : f32 to vector<1x256xf32>
    %157 = arith.addf %155, %156 : vector<1x256xf32>
    %158 = vector.broadcast %157 : vector<1x256xf32> to vector<8x256xf32>
    %159 = arith.mulf %104, %158 : vector<8x256xf32>
    %160 = arith.addf %103, %159 : vector<8x256xf32>
    %161 = vector.broadcast %153 : vector<1x256xf32> to vector<8x256xf32>
    %162 = arith.mulf %161, %160 : vector<8x256xf32>
    %163 = arith.maximumf %151, %162 : vector<8x256xf32>
    %164 = vector.extract_strided_slice %12 {offsets = [5, 0], sizes = [1, 256], strides = [1, 1]} : vector<8x256xf32> to vector<1x256xf32>
    %165 = vector.extract_strided_slice %83 {offsets = [13, 0], sizes = [1, 256], strides = [1, 1]} : vector<16x256xf32> to vector<1x256xf32>
    %166 = vector.broadcast %0 : f32 to vector<1x256xf32>
    %167 = arith.mulf %166, %164 : vector<1x256xf32>
    %168 = vector.broadcast %1 : f32 to vector<1x256xf32>
    %169 = arith.addf %167, %168 : vector<1x256xf32>
    %170 = vector.broadcast %169 : vector<1x256xf32> to vector<8x256xf32>
    %171 = arith.mulf %104, %170 : vector<8x256xf32>
    %172 = arith.addf %103, %171 : vector<8x256xf32>
    %173 = vector.broadcast %165 : vector<1x256xf32> to vector<8x256xf32>
    %174 = arith.mulf %173, %172 : vector<8x256xf32>
    %175 = arith.maximumf %163, %174 : vector<8x256xf32>
    %176 = vector.extract_strided_slice %12 {offsets = [6, 0], sizes = [1, 256], strides = [1, 1]} : vector<8x256xf32> to vector<1x256xf32>
    %177 = vector.extract_strided_slice %83 {offsets = [14, 0], sizes = [1, 256], strides = [1, 1]} : vector<16x256xf32> to vector<1x256xf32>
    %178 = vector.broadcast %0 : f32 to vector<1x256xf32>
    %179 = arith.mulf %178, %176 : vector<1x256xf32>
    %180 = vector.broadcast %1 : f32 to vector<1x256xf32>
    %181 = arith.addf %179, %180 : vector<1x256xf32>
    %182 = vector.broadcast %181 : vector<1x256xf32> to vector<8x256xf32>
    %183 = arith.mulf %104, %182 : vector<8x256xf32>
    %184 = arith.addf %103, %183 : vector<8x256xf32>
    %185 = vector.broadcast %177 : vector<1x256xf32> to vector<8x256xf32>
    %186 = arith.mulf %185, %184 : vector<8x256xf32>
    %187 = arith.maximumf %175, %186 : vector<8x256xf32>
    %188 = vector.extract_strided_slice %12 {offsets = [7, 0], sizes = [1, 256], strides = [1, 1]} : vector<8x256xf32> to vector<1x256xf32>
    %189 = vector.extract_strided_slice %83 {offsets = [15, 0], sizes = [1, 256], strides = [1, 1]} : vector<16x256xf32> to vector<1x256xf32>
    %190 = vector.broadcast %0 : f32 to vector<1x256xf32>
    %191 = arith.mulf %190, %188 : vector<1x256xf32>
    %192 = vector.broadcast %1 : f32 to vector<1x256xf32>
    %193 = arith.addf %191, %192 : vector<1x256xf32>
    %194 = vector.broadcast %193 : vector<1x256xf32> to vector<8x256xf32>
    %195 = arith.mulf %104, %194 : vector<8x256xf32>
    %196 = arith.addf %103, %195 : vector<8x256xf32>
    %197 = vector.broadcast %189 : vector<1x256xf32> to vector<8x256xf32>
    %198 = arith.mulf %197, %196 : vector<8x256xf32>
    %199 = arith.maximumf %187, %198 : vector<8x256xf32>
    %cst_30 = arith.constant 0.000000e+00 : f32
    %200 = vector.broadcast %cst_30 : f32 to vector<8x256xf32>
    %cst_31 = arith.constant 0.000000e+00 : f32
    %201 = vector.broadcast %cst_31 : f32 to vector<8x256xf32>
    %202 = vector.extract_strided_slice %12 {offsets = [0, 0], sizes = [1, 256], strides = [1, 1]} : vector<8x256xf32> to vector<1x256xf32>
    %203 = vector.broadcast %4 : f32 to vector<1x256xf32>
    %204 = arith.mulf %203, %202 : vector<1x256xf32>
    %205 = vector.broadcast %5 : f32 to vector<1x256xf32>
    %206 = arith.addf %204, %205 : vector<1x256xf32>
    %cst_32 = arith.constant 0.000000e+00 : f32
    %207 = vector.broadcast %cst_32 : f32 to vector<1x256xf32>
    %208 = arith.maximumf %206, %207 : vector<1x256xf32>
    %209 = arith.subf %115, %199 : vector<8x256xf32>
    %210 = math.exp %209 : vector<8x256xf32>
    %211 = arith.addf %200, %210 : vector<8x256xf32>
    %212 = vector.broadcast %208 : vector<1x256xf32> to vector<8x256xf32>
    %213 = arith.mulf %212, %210 : vector<8x256xf32>
    %214 = arith.addf %201, %213 : vector<8x256xf32>
    %215 = vector.extract_strided_slice %12 {offsets = [1, 0], sizes = [1, 256], strides = [1, 1]} : vector<8x256xf32> to vector<1x256xf32>
    %216 = vector.broadcast %4 : f32 to vector<1x256xf32>
    %217 = arith.mulf %216, %215 : vector<1x256xf32>
    %218 = vector.broadcast %5 : f32 to vector<1x256xf32>
    %219 = arith.addf %217, %218 : vector<1x256xf32>
    %cst_33 = arith.constant 0.000000e+00 : f32
    %220 = vector.broadcast %cst_33 : f32 to vector<1x256xf32>
    %221 = arith.maximumf %219, %220 : vector<1x256xf32>
    %222 = arith.subf %126, %199 : vector<8x256xf32>
    %223 = math.exp %222 : vector<8x256xf32>
    %224 = arith.addf %211, %223 : vector<8x256xf32>
    %225 = vector.broadcast %221 : vector<1x256xf32> to vector<8x256xf32>
    %226 = arith.mulf %225, %223 : vector<8x256xf32>
    %227 = arith.addf %214, %226 : vector<8x256xf32>
    %228 = vector.extract_strided_slice %12 {offsets = [2, 0], sizes = [1, 256], strides = [1, 1]} : vector<8x256xf32> to vector<1x256xf32>
    %229 = vector.broadcast %4 : f32 to vector<1x256xf32>
    %230 = arith.mulf %229, %228 : vector<1x256xf32>
    %231 = vector.broadcast %5 : f32 to vector<1x256xf32>
    %232 = arith.addf %230, %231 : vector<1x256xf32>
    %cst_34 = arith.constant 0.000000e+00 : f32
    %233 = vector.broadcast %cst_34 : f32 to vector<1x256xf32>
    %234 = arith.maximumf %232, %233 : vector<1x256xf32>
    %235 = arith.subf %138, %199 : vector<8x256xf32>
    %236 = math.exp %235 : vector<8x256xf32>
    %237 = arith.addf %224, %236 : vector<8x256xf32>
    %238 = vector.broadcast %234 : vector<1x256xf32> to vector<8x256xf32>
    %239 = arith.mulf %238, %236 : vector<8x256xf32>
    %240 = arith.addf %227, %239 : vector<8x256xf32>
    %241 = vector.extract_strided_slice %12 {offsets = [3, 0], sizes = [1, 256], strides = [1, 1]} : vector<8x256xf32> to vector<1x256xf32>
    %242 = vector.broadcast %4 : f32 to vector<1x256xf32>
    %243 = arith.mulf %242, %241 : vector<1x256xf32>
    %244 = vector.broadcast %5 : f32 to vector<1x256xf32>
    %245 = arith.addf %243, %244 : vector<1x256xf32>
    %cst_35 = arith.constant 0.000000e+00 : f32
    %246 = vector.broadcast %cst_35 : f32 to vector<1x256xf32>
    %247 = arith.maximumf %245, %246 : vector<1x256xf32>
    %248 = arith.subf %150, %199 : vector<8x256xf32>
    %249 = math.exp %248 : vector<8x256xf32>
    %250 = arith.addf %237, %249 : vector<8x256xf32>
    %251 = vector.broadcast %247 : vector<1x256xf32> to vector<8x256xf32>
    %252 = arith.mulf %251, %249 : vector<8x256xf32>
    %253 = arith.addf %240, %252 : vector<8x256xf32>
    %254 = vector.extract_strided_slice %12 {offsets = [4, 0], sizes = [1, 256], strides = [1, 1]} : vector<8x256xf32> to vector<1x256xf32>
    %255 = vector.broadcast %4 : f32 to vector<1x256xf32>
    %256 = arith.mulf %255, %254 : vector<1x256xf32>
    %257 = vector.broadcast %5 : f32 to vector<1x256xf32>
    %258 = arith.addf %256, %257 : vector<1x256xf32>
    %cst_36 = arith.constant 0.000000e+00 : f32
    %259 = vector.broadcast %cst_36 : f32 to vector<1x256xf32>
    %260 = arith.maximumf %258, %259 : vector<1x256xf32>
    %261 = arith.subf %162, %199 : vector<8x256xf32>
    %262 = math.exp %261 : vector<8x256xf32>
    %263 = arith.addf %250, %262 : vector<8x256xf32>
    %264 = vector.broadcast %260 : vector<1x256xf32> to vector<8x256xf32>
    %265 = arith.mulf %264, %262 : vector<8x256xf32>
    %266 = arith.addf %253, %265 : vector<8x256xf32>
    %267 = vector.extract_strided_slice %12 {offsets = [5, 0], sizes = [1, 256], strides = [1, 1]} : vector<8x256xf32> to vector<1x256xf32>
    %268 = vector.broadcast %4 : f32 to vector<1x256xf32>
    %269 = arith.mulf %268, %267 : vector<1x256xf32>
    %270 = vector.broadcast %5 : f32 to vector<1x256xf32>
    %271 = arith.addf %269, %270 : vector<1x256xf32>
    %cst_37 = arith.constant 0.000000e+00 : f32
    %272 = vector.broadcast %cst_37 : f32 to vector<1x256xf32>
    %273 = arith.maximumf %271, %272 : vector<1x256xf32>
    %274 = arith.subf %174, %199 : vector<8x256xf32>
    %275 = math.exp %274 : vector<8x256xf32>
    %276 = arith.addf %263, %275 : vector<8x256xf32>
    %277 = vector.broadcast %273 : vector<1x256xf32> to vector<8x256xf32>
    %278 = arith.mulf %277, %275 : vector<8x256xf32>
    %279 = arith.addf %266, %278 : vector<8x256xf32>
    %280 = vector.extract_strided_slice %12 {offsets = [6, 0], sizes = [1, 256], strides = [1, 1]} : vector<8x256xf32> to vector<1x256xf32>
    %281 = vector.broadcast %4 : f32 to vector<1x256xf32>
    %282 = arith.mulf %281, %280 : vector<1x256xf32>
    %283 = vector.broadcast %5 : f32 to vector<1x256xf32>
    %284 = arith.addf %282, %283 : vector<1x256xf32>
    %cst_38 = arith.constant 0.000000e+00 : f32
    %285 = vector.broadcast %cst_38 : f32 to vector<1x256xf32>
    %286 = arith.maximumf %284, %285 : vector<1x256xf32>
    %287 = arith.subf %186, %199 : vector<8x256xf32>
    %288 = math.exp %287 : vector<8x256xf32>
    %289 = arith.addf %276, %288 : vector<8x256xf32>
    %290 = vector.broadcast %286 : vector<1x256xf32> to vector<8x256xf32>
    %291 = arith.mulf %290, %288 : vector<8x256xf32>
    %292 = arith.addf %279, %291 : vector<8x256xf32>
    %293 = vector.extract_strided_slice %12 {offsets = [7, 0], sizes = [1, 256], strides = [1, 1]} : vector<8x256xf32> to vector<1x256xf32>
    %294 = vector.broadcast %4 : f32 to vector<1x256xf32>
    %295 = arith.mulf %294, %293 : vector<1x256xf32>
    %296 = vector.broadcast %5 : f32 to vector<1x256xf32>
    %297 = arith.addf %295, %296 : vector<1x256xf32>
    %cst_39 = arith.constant 0.000000e+00 : f32
    %298 = vector.broadcast %cst_39 : f32 to vector<1x256xf32>
    %299 = arith.maximumf %297, %298 : vector<1x256xf32>
    %300 = arith.subf %198, %199 : vector<8x256xf32>
    %301 = math.exp %300 : vector<8x256xf32>
    %302 = arith.addf %289, %301 : vector<8x256xf32>
    %303 = vector.broadcast %299 : vector<1x256xf32> to vector<8x256xf32>
    %304 = arith.mulf %303, %301 : vector<8x256xf32>
    %305 = arith.addf %292, %304 : vector<8x256xf32>
    %306 = tpu.reciprocal %302 {approx = true} : vector<8x256xf32> -> vector<8x256xf32>
    %307 = arith.mulf %302, %306 : vector<8x256xf32>
    %cst_40 = arith.constant 2.000000e+00 : f32
    %308 = vector.broadcast %cst_40 : f32 to vector<8x256xf32>
    %309 = arith.subf %308, %307 : vector<8x256xf32>
    %310 = arith.mulf %306, %309 : vector<8x256xf32>
    %311 = arith.mulf %305, %310 : vector<8x256xf32>
    %312 = vector.broadcast %6 : f32 to vector<8x256xf32>
    %313 = arith.mulf %312, %311 : vector<8x256xf32>
    %314 = vector.broadcast %7 : f32 to vector<8x256xf32>
    %315 = arith.addf %313, %314 : vector<8x256xf32>
    %cst_41 = arith.constant 0.000000e+00 : f32
    %316 = vector.broadcast %cst_41 : f32 to vector<8x256xf32>
    %317 = arith.maximumf %315, %316 : vector<8x256xf32>
    %318 = arith.addf %317, %98 : vector<8x256xf32>
    %c0_42 = arith.constant 0 : index
    %c0_43 = arith.constant 0 : index
    %319 = vector.load %arg4[%c0_42, %c0_43] : memref<8x256xf32, #tpu.memory_space<vmem>>, vector<8x256xf32>
    tpu.vector_store %arg4[%c0_42, %c0_43], %318 {strides = array<i32>} : memref<8x256xf32, #tpu.memory_space<vmem>>, vector<8x256xf32>,
    return
  }
  func.func @transform_0(%arg0: i32) -> i32 {
    %c0_i32 = arith.constant 0 : i32
    %c0_i32_0 = arith.constant 0 : i32
    return %c0_i32 : i32
  }
  func.func @transform_1(%arg0: i32) -> (i32, i32) {
    %c0_i32 = arith.constant 0 : i32
    %c0_i32_0 = arith.constant 0 : i32
    %c0_i32_1 = arith.constant 0 : i32
    return %c0_i32, %c0_i32_0 : i32, i32
  }
  func.func @transform_2(%arg0: i32) -> (i32, i32) {
    %c0_i32 = arith.constant 0 : i32
    %c0_i32_0 = arith.constant 0 : i32
    return %c0_i32, %arg0 : i32, i32
  }
  func.func @transform_3(%arg0: i32) -> (i32, i32) {
    %c0_i32 = arith.constant 0 : i32
    %c0_i32_0 = arith.constant 0 : i32
    return %c0_i32, %arg0 : i32, i32
  }
}

</mosaic_0001>

<llo_original>
// kernel: tpu_custom_call.1
$region0: #{tpu_custom_call.1}
  #allocation0 [shape = 'u32[]', space=smem, size = 0x4, offset = 0x4, fixed_abs, tag = 'smem constant byte address 0x4 - core index']
  #allocation1 [shape = 'u32[144,128]{1,0:T(1,128)}', space=vmem, size = 0x12000, scoped, tag = 'internal scratch']
  %s0 = inlined_call_operand.hbm [shape: f32[8], index: 0, kind: input, shape index: {}]
  %s1 = inlined_call_operand.hbm [shape: f32[64,128], index: 1, kind: input, shape index: {}]
  %s2 = inlined_call_operand.hbm [shape: f32[8,512], index: 2, kind: input, shape index: {}]
  %s3 = inlined_call_operand.hbm [shape: f32[8,512], index: 3, kind: output, shape index: {}]
  %s4 = sld [smem:[#allocation0]]
  $region57: #{tpu_custom_call.1} parent=0
    _
  %s6 = ssub.s32 1, %s4
  %s7 = scalar_select 0, %s6, %s4
  $region1: #{tpu_custom_call.1} parent=0
    #allocation2 [shape = 'u8[512]{0}', space=smem, size = 0x200, scoped, tag = 'input window, operand 0, single buffered']
    #allocation3 [shape = 's32[2]{0}', space=sflag, size = 0x8, scoped, tag = 'scoped memory for tpu_custom_call.1']
    #allocation4 [shape = 's32[2]{0}', space=sflag, size = 0x8, scoped, tag = 'scoped memory for tpu_custom_call.1']
    #allocation5 [shape = 's32[2]{0}', space=sflag, size = 0x8, scoped, tag = 'scoped memory for tpu_custom_call.1']
    #allocation6 [shape = 'u8[32768]{0}', space=vmem, size = 0x8000, scoped, tag = 'input window, operand 1, single buffered']
    #allocation7 [shape = 'u8[16384]{0}', space=vmem, size = 0x4000, scoped, tag = 'input window, operand 2']
    #allocation8 [shape = 's32[2]{0}', space=sflag, size = 0x8, scoped, tag = 'scoped memory for tpu_custom_call.1']
    #allocation9 [shape = 'u8[16384]{0}', space=vmem, size = 0x4000, scoped, tag = 'output window, operand 0']
    %8 = vsyncpa [#allocation5], 0
    %9 = vsyncpa [#allocation3], 0
    %10 = vsyncpa [#allocation8], 0
    %s11 = scalar_lea.sflag [#allocation8], 1
    %12 = vsyncpa %s11, 0
    %13 = vsyncpa [#allocation4], 0
    %s14 = scalar_lea.sflag [#allocation4], 1
    %15 = vsyncpa %s14, 0
    loop: start=0, step=1, limit=4
    $region2: #{tpu_custom_call.1} parent=1 // loop_pre_header
      _
    $region3: #{tpu_custom_call.1} parent=1 // loop_header
      %s17 = sphi 0, %s21
      %p18 = scmp.ge.s32.totalorder %s17, 4
      %s25 = sphi 0, %s25
      %s27 = sphi 0, %s25
      %s28 = sphi 0, %s27
      %s42 = sphi 0, %s28
      %s46 = sphi 0, %s46
      %s48 = sphi 0, %s46
      %s49 = sphi 0, %s48
      %s63 = sphi 0, %s49
      %s69 = sphi 0, %s71
      %s72 = sphi 0, %s69
      %s73 = sphi 0, %s72
      %s89 = sphi 0, %s73
      %s95 = sphi 0, %s97
      %s98 = sphi 0, %s95
      %s99 = sphi 0, %s98
      %s115 = sphi 0, %s99
    $region4: #{tpu_custom_call.1} parent=1 // loop_header_branch
      %20 = sbr.rel (%p18) target = $region8
    $region5: #{tpu_custom_call.1} parent=1 // loop_body
      %s22 = ssub.s32 %s17, 1
      %s23 = ssub.s32 %s17, 2
      %s24 = sadd.s32 %s17, 1
      %s26 = sadd.s32 %s25, 1
      %p29 = scmp.eq.s32.totalorder %s17, 1
      %p30 = scmp.ne.s32.totalorder %s25, %s27
      %p31 = scmp.eq.s32.totalorder %s17, 0
      %p32 = por %p30, %p31
      %p33 = scmp.ne.s32.totalorder %s25, %s27
      %p34 = scmp.eq.s32.totalorder %s22, 1
      %p35 = por %p33, %p34
      %p36 = scmp.ne.s32.totalorder %s27, %s28
      %p37 = scmp.eq.s32.totalorder %s22, 0
      %p38 = por %p36, %p37
      %p39 = scmp.ne.s32.totalorder %s27, %s28
      %p40 = scmp.eq.s32.totalorder %s23, 1
      %p41 = por %p39, %p40
      %p43 = scmp.ne.s32.totalorder %s28, %s42
      %p44 = scmp.eq.s32.totalorder %s23, 0
      %p45 = por %p43, %p44
      %s47 = sadd.s32 %s46, 1
      %p50 = scmp.eq.s32.totalorder %s17, 1
      %p51 = scmp.ne.s32.totalorder %s46, %s48
      %p52 = scmp.eq.s32.totalorder %s17, 0
      %p53 = por %p51, %p52
      %p54 = scmp.ne.s32.totalorder %s46, %s48
      %p55 = scmp.eq.s32.totalorder %s22, 1
      %p56 = por %p54, %p55
      %p57 = scmp.ne.s32.totalorder %s48, %s49
      %p58 = scmp.eq.s32.totalorder %s22, 0
      %p59 = por %p57, %p58
      %p60 = scmp.ne.s32.totalorder %s48, %s49
      %p61 = scmp.eq.s32.totalorder %s23, 1
      %p62 = por %p60, %p61
      %p64 = scmp.ne.s32.totalorder %s49, %s63
      %p65 = scmp.eq.s32.totalorder %s23, 0
      %p66 = por %p64, %p65
      %s67 = ssub.s32 %s17, %s24
      %p68 = scmp.eq.s32.totalorder %s67, 0
      %s70 = sadd.s32 %s69, 1
      %s71 = scalar_select %p68, %s69, %s70
      %p74 = pneg %p68
      %p75 = scmp.eq.s32.totalorder %s17, 1
      %p76 = por %p74, %p75
      %p77 = scmp.ne.s32.totalorder %s69, %s72
      %p78 = scmp.eq.s32.totalorder %s17, 0
      %p79 = por %p77, %p78
      %p80 = scmp.ne.s32.totalorder %s69, %s72
      %p81 = scmp.eq.s32.totalorder %s22, 1
      %p82 = por %p80, %p81
      %p83 = scmp.ne.s32.totalorder %s72, %s73
      %p84 = scmp.eq.s32.totalorder %s22, 0
      %p85 = por %p83, %p84
      %p86 = scmp.ne.s32.totalorder %s72, %s73
      %p87 = scmp.eq.s32.totalorder %s23, 1
      %p88 = por %p86, %p87
      %p90 = scmp.ne.s32.totalorder %s73, %s89
      %p91 = scmp.eq.s32.totalorder %s23, 0
      %p92 = por %p90, %p91
      %s93 = ssub.s32 %s17, %s24
      %p94 = scmp.eq.s32.totalorder %s93, 0
      %s96 = sadd.s32 %s95, 1
      %s97 = scalar_select %p94, %s95, %s96
      %p100 = pneg %p94
      %p101 = scmp.eq.s32.totalorder %s17, 1
      %p102 = por %p100, %p101
      %p103 = scmp.ne.s32.totalorder %s95, %s98
      %p104 = scmp.eq.s32.totalorder %s17, 0
      %p105 = por %p103, %p104
      %p106 = scmp.ne.s32.totalorder %s95, %s98
      %p107 = scmp.eq.s32.totalorder %s22, 1
      %p108 = por %p106, %p107
      %p109 = scmp.ne.s32.totalorder %s98, %s99
      %p110 = scmp.eq.s32.totalorder %s22, 0
      %p111 = por %p109, %p110
      %p112 = scmp.ne.s32.totalorder %s98, %s99
      %p113 = scmp.eq.s32.totalorder %s23, 1
      %p114 = por %p112, %p113
      %p116 = scmp.ne.s32.totalorder %s99, %s115
      %p117 = scmp.eq.s32.totalorder %s23, 0
      %p118 = por %p116, %p117
      %p119 = scmp.le.s32.totalorder 1, %s17
      %p120 = scmp.lt.s32.totalorder %s17, 3
      %p121 = pnand %p119, %p120
      %p122 = pneg %p121
      // Predicated region
      $region9: #{tpu_custom_call.1} parent=5 // pred_check
        _
      $region10: #{tpu_custom_call.1} parent=5 // pred_check_branch
        %124 = sbr.rel (%p121) target = $region12
      $region11: #{tpu_custom_call.1} parent=5 // pred_region
        %s125 = ssub.s32 %s17, 1
        // Predicated region
        $region13: #{tpu_custom_call.1} parent=11 // pred_check
          %p126 = pneg %p38
        $region14: #{tpu_custom_call.1} parent=11 // pred_check_branch
          %128 = sbr.rel (%p126) target = $region16
        $region15: #{tpu_custom_call.1} parent=11 // pred_region
          %s130 = ssub.s32 16, 16
          %131 = vsyncadd [#allocation5], %s130
          %134 = dma.hbm_to_smem %s0, 16, [#allocation2], [#allocation5]
        $region16: #{tpu_custom_call.1} parent=11 // pred_fallthru
          _
        // Predicated region
        $region17: #{tpu_custom_call.1} parent=11 // pred_check
          %p135 = pneg %p59
        $region18: #{tpu_custom_call.1} parent=11 // pred_check_branch
          %137 = sbr.rel (%p135) target = $region20
        $region19: #{tpu_custom_call.1} parent=11 // pred_region
          %s139 = ssub.s32 1024, 1024
          %140 = vsyncadd [#allocation3], %s139
          %s141 = sshll.u32 [#allocation6], 4
          %s142 = int_to_ptr.vmem [resolvable:$true] %s141
          %147 = dma.hbm_to_vmem [thread:$0]  %s1, 1024, %s142, [#allocation3], 128, 128, 8
        $region20: #{tpu_custom_call.1} parent=11 // pred_fallthru
          _
      $region12: #{tpu_custom_call.1} parent=5 // pred_fallthru
        _
      %p148 = scmp.lt.s32.totalorder %s17, 2
      // Predicated region
      $region21: #{tpu_custom_call.1} parent=5 // pred_check
        %p149 = pneg %p148
      $region22: #{tpu_custom_call.1} parent=5 // pred_check_branch
        %151 = sbr.rel (%p149) target = $region24
      $region23: #{tpu_custom_call.1} parent=5 // pred_region
        // Predicated region
        $region25: #{tpu_custom_call.1} parent=23 // pred_check
          %p152 = pneg %p79
        $region26: #{tpu_custom_call.1} parent=23 // pred_check_branch
          %154 = sbr.rel (%p152) target = $region28
        $region27: #{tpu_custom_call.1} parent=23 // pred_region
          %s155 = sand.u32 %s69, 1
          %s156 = scalar_lea.sflag [#allocation8], %s155
          %s157 = sand.u32 %s69, 1
          %s158 = smul.addr %s157, 16
          %s159 = scalar_lea.vmem [#allocation7], %s158
          %s160 = smul.u32 2, %s17
          %s162 = ssub.s32 256, 256
          %163 = vsyncadd %s156, %s162
          %s164 = smul.addr %s160, 128
          %s165 = scalar_lea.hbm %s2, %s164
          %s167 = sshll.u32 %s159, 4
          %s168 = int_to_ptr.vmem [resolvable:$true] %s167
          %170 = dma.hbm_to_vmem [thread:$0]  %s165, 256, %s168, %s156
        $region28: #{tpu_custom_call.1} parent=23 // pred_fallthru
          _
      $region24: #{tpu_custom_call.1} parent=5 // pred_fallthru
        _
      %p171 = scmp.le.s32.totalorder 1, %s17
      %p172 = scmp.lt.s32.totalorder %s17, 3
      %p173 = pnand %p171, %p172
      %p174 = pneg %p173
      // Predicated region
      $region29: #{tpu_custom_call.1} parent=5 // pred_check
        _
      $region30: #{tpu_custom_call.1} parent=5 // pred_check_branch
        %176 = sbr.rel (%p173) target = $region32
      $region31: #{tpu_custom_call.1} parent=5 // pred_region
        %s177 = ssub.s32 %s17, 1
        // Predicated region
        $region33: #{tpu_custom_call.1} parent=31 // pred_check
          %p178 = pneg %p38
        $region34: #{tpu_custom_call.1} parent=31 // pred_check_branch
          %180 = sbr.rel (%p178) target = $region36
        $region35: #{tpu_custom_call.1} parent=31 // pred_region
          %181 = dma.done [#allocation5], 16
        $region36: #{tpu_custom_call.1} parent=31 // pred_fallthru
          _
        // Predicated region
        $region37: #{tpu_custom_call.1} parent=31 // pred_check
          %p182 = pneg %p59
        $region38: #{tpu_custom_call.1} parent=31 // pred_check_branch
          %184 = sbr.rel (%p182) target = $region40
        $region39: #{tpu_custom_call.1} parent=31 // pred_region
          %185 = dma.done [#allocation3], 1024
        $region40: #{tpu_custom_call.1} parent=31 // pred_fallthru
          _
        %s186 = sand.u32 %s72, 1
        %s187 = scalar_lea.sflag [#allocation8], %s186
        %s188 = sand.u32 %s72, 1
        %s189 = smul.addr %s188, 16
        %s190 = scalar_lea.vmem [#allocation7], %s189
        // Predicated region
        $region41: #{tpu_custom_call.1} parent=31 // pred_check
          %p191 = pneg %p85
        $region42: #{tpu_custom_call.1} parent=31 // pred_check_branch
          %193 = sbr.rel (%p191) target = $region44
        $region43: #{tpu_custom_call.1} parent=31 // pred_region
          %194 = dma.done %s187, 256
        $region44: #{tpu_custom_call.1} parent=31 // pred_fallthru
          _
        %195 = sfence
        %p196 = pneg %p38
        %p197 = pneg %p35
        %p198 = pneg %p59
        %p199 = pneg %p56
        %s200 = sand.u32 %s72, 1
        %s201 = scalar_lea.sflag [#allocation8], %s200
        %s202 = sand.u32 %s72, 1
        %s203 = smul.addr %s202, 16
        %s204 = scalar_lea.vmem [#allocation7], %s203
        %p205 = pneg %p85
        %p206 = pneg %p82
        %p207 = pneg %p111
        %p208 = pneg %p108
        %s209 = sand.u32 %s98, 1
        %s210 = scalar_lea.sflag [#allocation4], %s209
        %s211 = sand.u32 %s98, 1
        %s212 = smul.addr %s211, 16
        %s213 = scalar_lea.vmem [#allocation9], %s212
        %s214 = smul.u32 2, %s22
        %s215 = smul.u32 2, %s22
        %s217 = sld [smem:[#allocation2]]
        %s218 = sld [smem:[#allocation2 + $0x1]]
        %s219 = sld [smem:[#allocation2 + $0x2]]
        %s220 = sld [smem:[#allocation2 + $0x3]]
        %s221 = sld [smem:[#allocation2 + $0x4]]
        %s222 = sld [smem:[#allocation2 + $0x5]]
        %s223 = sld [smem:[#allocation2 + $0x6]]
        %s224 = sld [smem:[#allocation2 + $0x7]]
        %v225 = vld [vmem:[#allocation6] sm:$0xff]
        %v226 = vld [vmem:[#allocation6 + $0x8] sm:$0xff]
        %v227 = vld [vmem:[#allocation6 + $0x10] sm:$0xff]
        %v228 = vld [vmem:[#allocation6 + $0x18] sm:$0xff]
        %v229 = vld [vmem:[#allocation6 + $0x20] sm:$0xff]
        %v230 = vld [vmem:[#allocation6 + $0x28] sm:$0xff]
        %v231 = vld [vmem:[#allocation6 + $0x30] sm:$0xff]
        %v232 = vld [vmem:[#allocation6 + $0x38] sm:$0xff]
        %v233 = vld [vmem:[#allocation6] sm:$0xff]
        %v234 = vld [vmem:[#allocation6 + $0x8] sm:$0xff]
        %v235 = vld [vmem:[%s190] sm:$0xff]
        %v236 = vld [vmem:[%s190 + $0x8] sm:$0xff]
        %v237 = vpack.c.bf16 %v226, %v225
        %v238 = vpack.c.bf16 %v228, %v227
        %v239 = vpack.c.bf16 %v230, %v229
        %v240 = vpack.c.bf16 %v232, %v231
        %v241 = vunpack.c.l.bf16 %v237
        %v242 = vunpack.c.h.bf16 %v237
        %v243 = vunpack.c.l.bf16 %v238
        %v244 = vunpack.c.h.bf16 %v238
        %v245 = vunpack.c.l.bf16 %v239
        %v246 = vunpack.c.h.bf16 %v239
        %v247 = vunpack.c.l.bf16 %v240
        %v248 = vunpack.c.h.bf16 %v240
        %v249 = vsub.f32 %v225, %v241
        %v250 = vsub.f32 %v226, %v242
        %v251 = vsub.f32 %v227, %v243
        %v252 = vsub.f32 %v228, %v244
        %v253 = vsub.f32 %v229, %v245
        %v254 = vsub.f32 %v230, %v246
        %v255 = vsub.f32 %v231, %v247
        %v256 = vsub.f32 %v232, %v248
        %v257 = vpack.c.bf16 %v250, %v249
        %v258 = vpack.c.bf16 %v252, %v251
        %v259 = vpack.c.bf16 %v254, %v253
        %v260 = vpack.c.bf16 %v256, %v255
        %v261 = vpack.c.bf16 %v235, %v235
        %v262 = vpack.c.bf16 %v236, %v236
        %v263 = vunpack.c.l.bf16 %v261
        %v264 = vunpack.c.l.bf16 %v262
        %v265 = vsub.f32 %v235, %v263
        %v266 = vsub.f32 %v236, %v264
        %v267 = vpack.c.bf16 %v265, %v265
        %v268 = vpack.c.bf16 %v266, %v266
        %vm269 = vcmask 64512
        %v271 = vsel %vm269, %v237, 0
        %v274 = vsel %vm269, %v238, 0
        %v277 = vsel %vm269, %v239, 0
        %v280 = vsel %vm269, %v240, 0
        %vm282 = vcmask 1043456
        %v284 = vsel %vm282, %v267, 0
        %v287 = vsel %vm282, %v268, 0
        %289 = vmatprep.subr.bf16.mxu0 0
        %290 = vmatpush1.bf16.msra.mxu0 0
        %291 = vmatprep.subr.bf16.mxu0 0
        %292 = vmatpush1.bf16.msra.mxu0 0
        %293 = vmatprep.subr.bf16.mxu0 0
        %294 = vmatpush1.bf16.msra.mxu0 0
        %295 = vmatprep.subr.bf16.mxu0 0
        %296 = vmatpush1.bf16.msra.mxu0 0
        %297 = vmatprep.subr.bf16.mxu0 0
        %298 = vmatpush1.bf16.msra.mxu0 0
        %299 = vmatprep.subr.bf16.mxu0 0
        %300 = vmatpush1.bf16.msra.mxu0 0
        %301 = vmatprep.subr.bf16.mxu0 0
        %302 = vmatpush1.bf16.msra.mxu0 0
        %303 = vmatprep.subr.bf16.mxu0 %v287
        %304 = vmatpush1.bf16.msra.mxu0 %v284
        %305 = vmatprep.subr.bf16.mxu0 0
        %306 = vmatpush2.bf16.msra.mxu0 0
        %307 = vmatprep.subr.bf16.mxu0 0
        %308 = vmatpush2.bf16.msra.mxu0 0
        %309 = vmatprep.subr.bf16.mxu0 0
        %310 = vmatpush2.bf16.msra.mxu0 0
        %311 = vmatprep.subr.bf16.mxu0 0
        %312 = vmatpush2.bf16.msra.mxu0 0
        %313 = vmatprep.subr.bf16.mxu0 0
        %314 = vmatpush2.bf16.msra.mxu0 0
        %315 = vmatprep.subr.bf16.mxu0 0
        %316 = vmatpush2.bf16.msra.mxu0 0
        %317 = vmatprep.subr.bf16.mxu0 0
        %318 = vmatpush2.bf16.msra.mxu0 0
        %319 = vmatprep.subr.bf16.mxu0 0
        %320 = vmatpush2.bf16.msra.mxu0 0
        %321 = vmatprep.mubr.bf16.mxu0 0
        %322 = vmatmul.mubr.bf16.gmra.mxu0 %v271
        %v323 = vpop.f32.mrf.mxu0
        %v324 = vadd.f32 0.0, %v323
        %v325 = vpop.f32.mrf.mxu0
        %v326 = vadd.f32 0.0, %v325
        %v327 = vpop.f32.mrf.mxu0
        %v328 = vadd.f32 0.0, %v327
        %v329 = vpop.f32.mrf.mxu0
        %v330 = vadd.f32 0.0, %v329
        %331 = vmatprep.mubr.bf16.mxu0 0
        %332 = vmatmul.mubr.bf16.gmra.mxu0 %v274
        %v333 = vpop.f32.mrf.mxu0
        %v334 = vadd.f32 0.0, %v333
        %v335 = vpop.f32.mrf.mxu0
        %v336 = vadd.f32 0.0, %v335
        %v337 = vpop.f32.mrf.mxu0
        %v338 = vadd.f32 0.0, %v337
        %v339 = vpop.f32.mrf.mxu0
        %v340 = vadd.f32 0.0, %v339
        %341 = vmatprep.mubr.bf16.mxu0 0
        %342 = vmatmul.mubr.bf16.gmra.mxu0 %v277
        %v343 = vpop.f32.mrf.mxu0
        %v344 = vadd.f32 0.0, %v343
        %v345 = vpop.f32.mrf.mxu0
        %v346 = vadd.f32 0.0, %v345
        %v347 = vpop.f32.mrf.mxu0
        %v348 = vadd.f32 0.0, %v347
        %v349 = vpop.f32.mrf.mxu0
        %v350 = vadd.f32 0.0, %v349
        %351 = vmatprep.mubr.bf16.mxu0 0
        %352 = vmatmul.mubr.bf16.gmra.mxu0 %v280
        %v353 = vpop.f32.mrf.mxu0
        %v354 = vadd.f32 0.0, %v353
        %v355 = vpop.f32.mrf.mxu0
        %v356 = vadd.f32 0.0, %v355
        %v357 = vpop.f32.mrf.mxu0
        %v358 = vadd.f32 0.0, %v357
        %v359 = vpop.f32.mrf.mxu0
        %v360 = vadd.f32 0.0, %v359
        %361 = vdwg.mxu0
        %v363 = vsel %vm282, %v261, 0
        %v366 = vsel %vm282, %v262, 0
        %368 = vmatprep.subr.bf16.mxu0 0
        %369 = vmatpush1.bf16.msra.mxu0 0
        %370 = vmatprep.subr.bf16.mxu0 0
        %371 = vmatpush1.bf16.msra.mxu0 0
        %372 = vmatprep.subr.bf16.mxu0 0
        %373 = vmatpush1.bf16.msra.mxu0 0
        %374 = vmatprep.subr.bf16.mxu0 0
        %375 = vmatpush1.bf16.msra.mxu0 0
        %376 = vmatprep.subr.bf16.mxu0 0
        %377 = vmatpush1.bf16.msra.mxu0 0
        %378 = vmatprep.subr.bf16.mxu0 0
        %379 = vmatpush1.bf16.msra.mxu0 0
        %380 = vmatprep.subr.bf16.mxu0 0
        %381 = vmatpush1.bf16.msra.mxu0 0
        %382 = vmatprep.subr.bf16.mxu0 %v366
        %383 = vmatpush1.bf16.msra.mxu0 %v363
        %384 = vmatprep.subr.bf16.mxu0 0
        %385 = vmatpush2.bf16.msra.mxu0 0
        %386 = vmatprep.subr.bf16.mxu0 0
        %387 = vmatpush2.bf16.msra.mxu0 0
        %388 = vmatprep.subr.bf16.mxu0 0
        %389 = vmatpush2.bf16.msra.mxu0 0
        %390 = vmatprep.subr.bf16.mxu0 0
        %391 = vmatpush2.bf16.msra.mxu0 0
        %392 = vmatprep.subr.bf16.mxu0 0
        %393 = vmatpush2.bf16.msra.mxu0 0
        %394 = vmatprep.subr.bf16.mxu0 0
        %395 = vmatpush2.bf16.msra.mxu0 0
        %396 = vmatprep.subr.bf16.mxu0 0
        %397 = vmatpush2.bf16.msra.mxu0 0
        %398 = vmatprep.subr.bf16.mxu0 0
        %399 = vmatpush2.bf16.msra.mxu0 0
        %400 = vmatprep.mubr.bf16.mxu0 0
        %401 = vmatmul.mubr.bf16.gmra.mxu0 %v271
        %v402 = vpop.f32.mrf.mxu0
        %v403 = vadd.f32 %v324, %v402
        %v404 = vpop.f32.mrf.mxu0
        %v405 = vadd.f32 %v326, %v404
        %v406 = vpop.f32.mrf.mxu0
        %v407 = vadd.f32 %v328, %v406
        %v408 = vpop.f32.mrf.mxu0
        %v409 = vadd.f32 %v330, %v408
        %410 = vmatprep.mubr.bf16.mxu0 0
        %411 = vmatmul.mubr.bf16.gmra.mxu0 %v274
        %v412 = vpop.f32.mrf.mxu0
        %v413 = vadd.f32 %v334, %v412
        %v414 = vpop.f32.mrf.mxu0
        %v415 = vadd.f32 %v336, %v414
        %v416 = vpop.f32.mrf.mxu0
        %v417 = vadd.f32 %v338, %v416
        %v418 = vpop.f32.mrf.mxu0
        %v419 = vadd.f32 %v340, %v418
        %420 = vmatprep.mubr.bf16.mxu0 0
        %421 = vmatmul.mubr.bf16.gmra.mxu0 %v277
        %v422 = vpop.f32.mrf.mxu0
        %v423 = vadd.f32 %v344, %v422
        %v424 = vpop.f32.mrf.mxu0
        %v425 = vadd.f32 %v346, %v424
        %v426 = vpop.f32.mrf.mxu0
        %v427 = vadd.f32 %v348, %v426
        %v428 = vpop.f32.mrf.mxu0
        %v429 = vadd.f32 %v350, %v428
        %430 = vmatprep.mubr.bf16.mxu0 0
        %431 = vmatmul.mubr.bf16.gmra.mxu0 %v280
        %v432 = vpop.f32.mrf.mxu0
        %v433 = vadd.f32 %v354, %v432
        %v434 = vpop.f32.mrf.mxu0
        %v435 = vadd.f32 %v356, %v434
        %v436 = vpop.f32.mrf.mxu0
        %v437 = vadd.f32 %v358, %v436
        %v438 = vpop.f32.mrf.mxu0
        %v439 = vadd.f32 %v360, %v438
        %440 = vdwg.mxu0
        %v442 = vsel %vm269, %v257, 0
        %v445 = vsel %vm269, %v258, 0
        %v448 = vsel %vm269, %v259, 0
        %v451 = vsel %vm269, %v260, 0
        %453 = vmatprep.subr.bf16.mxu0 0
        %454 = vmatpush1.bf16.msra.mxu0 0
        %455 = vmatprep.subr.bf16.mxu0 0
        %456 = vmatpush1.bf16.msra.mxu0 0
        %457 = vmatprep.subr.bf16.mxu0 0
        %458 = vmatpush1.bf16.msra.mxu0 0
        %459 = vmatprep.subr.bf16.mxu0 0
        %460 = vmatpush1.bf16.msra.mxu0 0
        %461 = vmatprep.subr.bf16.mxu0 0
        %462 = vmatpush1.bf16.msra.mxu0 0
        %463 = vmatprep.subr.bf16.mxu0 0
        %464 = vmatpush1.bf16.msra.mxu0 0
        %465 = vmatprep.subr.bf16.mxu0 0
        %466 = vmatpush1.bf16.msra.mxu0 0
        %467 = vmatprep.subr.bf16.mxu0 %v366
        %468 = vmatpush1.bf16.msra.mxu0 %v363
        %469 = vmatprep.subr.bf16.mxu0 0
        %470 = vmatpush2.bf16.msra.mxu0 0
        %471 = vmatprep.subr.bf16.mxu0 0
        %472 = vmatpush2.bf16.msra.mxu0 0
        %473 = vmatprep.subr.bf16.mxu0 0
        %474 = vmatpush2.bf16.msra.mxu0 0
        %475 = vmatprep.subr.bf16.mxu0 0
        %476 = vmatpush2.bf16.msra.mxu0 0
        %477 = vmatprep.subr.bf16.mxu0 0
        %478 = vmatpush2.bf16.msra.mxu0 0
        %479 = vmatprep.subr.bf16.mxu0 0
        %480 = vmatpush2.bf16.msra.mxu0 0
        %481 = vmatprep.subr.bf16.mxu0 0
        %482 = vmatpush2.bf16.msra.mxu0 0
        %483 = vmatprep.subr.bf16.mxu0 0
        %484 = vmatpush2.bf16.msra.mxu0 0
        %485 = vmatprep.mubr.bf16.mxu0 0
        %486 = vmatmul.mubr.bf16.gmra.mxu0 %v442
        %v487 = vpop.f32.mrf.mxu0
        %v488 = vadd.f32 0.0, %v487
        %v489 = vpop.f32.mrf.mxu0
        %v490 = vadd.f32 0.0, %v489
        %v491 = vpop.f32.mrf.mxu0
        %v492 = vadd.f32 0.0, %v491
        %v493 = vpop.f32.mrf.mxu0
        %v494 = vadd.f32 0.0, %v493
        %495 = vmatprep.mubr.bf16.mxu0 0
        %496 = vmatmul.mubr.bf16.gmra.mxu0 %v445
        %v497 = vpop.f32.mrf.mxu0
        %v498 = vadd.f32 0.0, %v497
        %v499 = vpop.f32.mrf.mxu0
        %v500 = vadd.f32 0.0, %v499
        %v501 = vpop.f32.mrf.mxu0
        %v502 = vadd.f32 0.0, %v501
        %v503 = vpop.f32.mrf.mxu0
        %v504 = vadd.f32 0.0, %v503
        %505 = vmatprep.mubr.bf16.mxu0 0
        %506 = vmatmul.mubr.bf16.gmra.mxu0 %v448
        %v507 = vpop.f32.mrf.mxu0
        %v508 = vadd.f32 0.0, %v507
        %v509 = vpop.f32.mrf.mxu0
        %v510 = vadd.f32 0.0, %v509
        %v511 = vpop.f32.mrf.mxu0
        %v512 = vadd.f32 0.0, %v511
        %v513 = vpop.f32.mrf.mxu0
        %v514 = vadd.f32 0.0, %v513
        %515 = vmatprep.mubr.bf16.mxu0 0
        %516 = vmatmul.mubr.bf16.gmra.mxu0 %v451
        %v517 = vpop.f32.mrf.mxu0
        %v518 = vadd.f32 0.0, %v517
        %v519 = vpop.f32.mrf.mxu0
        %v520 = vadd.f32 0.0, %v519
        %v521 = vpop.f32.mrf.mxu0
        %v522 = vadd.f32 0.0, %v521
        %v523 = vpop.f32.mrf.mxu0
        %v524 = vadd.f32 0.0, %v523
        %525 = vdwg.mxu0
        %v526 = vadd.f32 %v403, %v488
        %v527 = vadd.f32 %v405, %v490
        %v528 = vadd.f32 %v407, %v492
        %v529 = vadd.f32 %v409, %v494
        %v530 = vadd.f32 %v413, %v498
        %v531 = vadd.f32 %v415, %v500
        %v532 = vadd.f32 %v417, %v502
        %v533 = vadd.f32 %v419, %v504
        %v534 = vadd.f32 %v423, %v508
        %v535 = vadd.f32 %v425, %v510
        %v536 = vadd.f32 %v427, %v512
        %v537 = vadd.f32 %v429, %v514
        %v538 = vadd.f32 %v433, %v518
        %v539 = vadd.f32 %v435, %v520
        %v540 = vadd.f32 %v437, %v522
        %v541 = vadd.f32 %v439, %v524
        %543 = vset.pattern.permute.xlu0 72
        %544 = vperm.xlu0 %543, %v225
        %v545 = vpop.permute.xlu0 %544
        %548 = vset.pattern.permute.xlu0 72
        %549 = vperm.xlu0 %548, %v226
        %v550 = vpop.permute.xlu0 %549
        %553 = vset.pattern.permute.xlu0 72
        %554 = vperm.xlu0 %553, %v227
        %v555 = vpop.permute.xlu0 %554
        %558 = vset.pattern.permute.xlu0 72
        %559 = vperm.xlu0 %558, %v228
        %v560 = vpop.permute.xlu0 %559
        %563 = vset.pattern.permute.xlu0 72
        %564 = vperm.xlu0 %563, %v229
        %v565 = vpop.permute.xlu0 %564
        %568 = vset.pattern.permute.xlu0 72
        %569 = vperm.xlu0 %568, %v230
        %v570 = vpop.permute.xlu0 %569
        %573 = vset.pattern.permute.xlu0 72
        %574 = vperm.xlu0 %573, %v231
        %v575 = vpop.permute.xlu0 %574
        %578 = vset.pattern.permute.xlu0 72
        %579 = vperm.xlu0 %578, %v232
        %v580 = vpop.permute.xlu0 %579
        %v582 = vadd.f32 %v526, %v545
        %v583 = vadd.f32 %v527, %v545
        %v584 = vadd.f32 %v528, %v550
        %v585 = vadd.f32 %v529, %v550
        %v586 = vadd.f32 %v530, %v555
        %v587 = vadd.f32 %v531, %v555
        %v588 = vadd.f32 %v532, %v560
        %v589 = vadd.f32 %v533, %v560
        %v590 = vadd.f32 %v534, %v565
        %v591 = vadd.f32 %v535, %v565
        %v592 = vadd.f32 %v536, %v570
        %v593 = vadd.f32 %v537, %v570
        %v594 = vadd.f32 %v538, %v575
        %v595 = vadd.f32 %v539, %v575
        %v596 = vadd.f32 %v540, %v580
        %v597 = vadd.f32 %v541, %v580
        %v598 = vmul.f32 %v582, 0.5
        %v599 = vmul.f32 %v583, 0.5
        %v600 = vmul.f32 %v584, 0.5
        %v601 = vmul.f32 %v585, 0.5
        %v602 = vmul.f32 %v586, 0.5
        %v603 = vmul.f32 %v587, 0.5
        %v604 = vmul.f32 %v588, 0.5
        %v605 = vmul.f32 %v589, 0.5
        %v606 = vmul.f32 %v590, 0.5
        %v607 = vmul.f32 %v591, 0.5
        %v608 = vmul.f32 %v592, 0.5
        %v609 = vmul.f32 %v593, 0.5
        %v610 = vmul.f32 %v594, 0.5
        %v611 = vmul.f32 %v595, 0.5
        %v612 = vmul.f32 %v596, 0.5
        %v613 = vmul.f32 %v597, 0.5
        %v614 = vmul.f32 %v582, 0.70710677
        %v615 = vmul.f32 %v583, 0.70710677
        %v616 = vmul.f32 %v584, 0.70710677
        %v617 = vmul.f32 %v585, 0.70710677
        %v618 = vmul.f32 %v586, 0.70710677
        %v619 = vmul.f32 %v587, 0.70710677
        %v620 = vmul.f32 %v588, 0.70710677
        %v621 = vmul.f32 %v589, 0.70710677
        %v622 = vmul.f32 %v590, 0.70710677
        %v623 = vmul.f32 %v591, 0.70710677
        %v624 = vmul.f32 %v592, 0.70710677
        %v625 = vmul.f32 %v593, 0.70710677
        %v626 = vmul.f32 %v594, 0.70710677
        %v627 = vmul.f32 %v595, 0.70710677
        %v628 = vmul.f32 %v596, 0.70710677
        %v629 = vmul.f32 %v597, 0.70710677
        %vm630 = vcmp.ge.f32.partialorder %v614, 0.0
        %vm631 = vcmp.ge.f32.partialorder %v615, 0.0
        %vm632 = vcmp.ge.f32.partialorder %v616, 0.0
        %vm633 = vcmp.ge.f32.partialorder %v617, 0.0
        %vm634 = vcmp.ge.f32.partialorder %v618, 0.0
        %vm635 = vcmp.ge.f32.partialorder %v619, 0.0
        %vm636 = vcmp.ge.f32.partialorder %v620, 0.0
        %vm637 = vcmp.ge.f32.partialorder %v621, 0.0
        %vm638 = vcmp.ge.f32.partialorder %v622, 0.0
        %vm639 = vcmp.ge.f32.partialorder %v623, 0.0
        %vm640 = vcmp.ge.f32.partialorder %v624, 0.0
        %vm641 = vcmp.ge.f32.partialorder %v625, 0.0
        %vm642 = vcmp.ge.f32.partialorder %v626, 0.0
        %vm643 = vcmp.ge.f32.partialorder %v627, 0.0
        %vm644 = vcmp.ge.f32.partialorder %v628, 0.0
        %vm645 = vcmp.ge.f32.partialorder %v629, 0.0
        %v646 = vsel %vm630, 1.0, -1.0
        %v647 = vsel %vm631, 1.0, -1.0
        %v648 = vsel %vm632, 1.0, -1.0
        %v649 = vsel %vm633, 1.0, -1.0
        %v650 = vsel %vm634, 1.0, -1.0
        %v651 = vsel %vm635, 1.0, -1.0
        %v652 = vsel %vm636, 1.0, -1.0
        %v653 = vsel %vm637, 1.0, -1.0
        %v654 = vsel %vm638, 1.0, -1.0
        %v655 = vsel %vm639, 1.0, -1.0
        %v656 = vsel %vm640, 1.0, -1.0
        %v657 = vsel %vm641, 1.0, -1.0
        %v658 = vsel %vm642, 1.0, -1.0
        %v659 = vsel %vm643, 1.0, -1.0
        %v660 = vsel %vm644, 1.0, -1.0
        %v661 = vsel %vm645, 1.0, -1.0
        %v662 = vand.u32 2147483647, %v614
        %v663 = vand.u32 2147483647, %v615
        %v664 = vand.u32 2147483647, %v616
        %v665 = vand.u32 2147483647, %v617
        %v666 = vand.u32 2147483647, %v618
        %v667 = vand.u32 2147483647, %v619
        %v668 = vand.u32 2147483647, %v620
        %v669 = vand.u32 2147483647, %v621
        %v670 = vand.u32 2147483647, %v622
        %v671 = vand.u32 2147483647, %v623
        %v672 = vand.u32 2147483647, %v624
        %v673 = vand.u32 2147483647, %v625
        %v674 = vand.u32 2147483647, %v626
        %v675 = vand.u32 2147483647, %v627
        %v676 = vand.u32 2147483647, %v628
        %v677 = vand.u32 2147483647, %v629
        %v678 = vmul.f32 %v662, 0.3275911
        %v679 = vmul.f32 %v663, 0.3275911
        %v680 = vmul.f32 %v664, 0.3275911
        %v681 = vmul.f32 %v665, 0.3275911
        %v682 = vmul.f32 %v666, 0.3275911
        %v683 = vmul.f32 %v667, 0.3275911
        %v684 = vmul.f32 %v668, 0.3275911
        %v685 = vmul.f32 %v669, 0.3275911
        %v686 = vmul.f32 %v670, 0.3275911
        %v687 = vmul.f32 %v671, 0.3275911
        %v688 = vmul.f32 %v672, 0.3275911
        %v689 = vmul.f32 %v673, 0.3275911
        %v690 = vmul.f32 %v674, 0.3275911
        %v691 = vmul.f32 %v675, 0.3275911
        %v692 = vmul.f32 %v676, 0.3275911
        %v693 = vmul.f32 %v677, 0.3275911
        %v694 = vadd.f32 %v678, 1.0
        %v695 = vadd.f32 %v679, 1.0
        %v696 = vadd.f32 %v680, 1.0
        %v697 = vadd.f32 %v681, 1.0
        %v698 = vadd.f32 %v682, 1.0
        %v699 = vadd.f32 %v683, 1.0
        %v700 = vadd.f32 %v684, 1.0
        %v701 = vadd.f32 %v685, 1.0
        %v702 = vadd.f32 %v686, 1.0
        %v703 = vadd.f32 %v687, 1.0
        %v704 = vadd.f32 %v688, 1.0
        %v705 = vadd.f32 %v689, 1.0
        %v706 = vadd.f32 %v690, 1.0
        %v707 = vadd.f32 %v691, 1.0
        %v708 = vadd.f32 %v692, 1.0
        %v709 = vadd.f32 %v693, 1.0
        %v710 = vrcp.pop %v694
        %v711 = vmul.f32 1.0, %v710
        %v712 = vrcp.pop %v695
        %v713 = vmul.f32 1.0, %v712
        %v714 = vrcp.pop %v696
        %v715 = vmul.f32 1.0, %v714
        %v716 = vrcp.pop %v697
        %v717 = vmul.f32 1.0, %v716
        %v718 = vrcp.pop %v698
        %v719 = vmul.f32 1.0, %v718
        %v720 = vrcp.pop %v699
        %v721 = vmul.f32 1.0, %v720
        %v722 = vrcp.pop %v700
        %v723 = vmul.f32 1.0, %v722
        %v724 = vrcp.pop %v701
        %v725 = vmul.f32 1.0, %v724
        %v726 = vrcp.pop %v702
        %v727 = vmul.f32 1.0, %v726
        %v728 = vrcp.pop %v703
        %v729 = vmul.f32 1.0, %v728
        %v730 = vrcp.pop %v704
        %v731 = vmul.f32 1.0, %v730
        %v732 = vrcp.pop %v705
        %v733 = vmul.f32 1.0, %v732
        %v734 = vrcp.pop %v706
        %v735 = vmul.f32 1.0, %v734
        %v736 = vrcp.pop %v707
        %v737 = vmul.f32 1.0, %v736
        %v738 = vrcp.pop %v708
        %v739 = vmul.f32 1.0, %v738
        %v740 = vrcp.pop %v709
        %v741 = vmul.f32 1.0, %v740
        %v742 = vmul.f32 %v711, 1.0614054
        %v743 = vmul.f32 %v713, 1.0614054
        %v744 = vmul.f32 %v715, 1.0614054
        %v745 = vmul.f32 %v717, 1.0614054
        %v746 = vmul.f32 %v719, 1.0614054
        %v747 = vmul.f32 %v721, 1.0614054
        %v748 = vmul.f32 %v723, 1.0614054
        %v749 = vmul.f32 %v725, 1.0614054
        %v750 = vmul.f32 %v727, 1.0614054
        %v751 = vmul.f32 %v729, 1.0614054
        %v752 = vmul.f32 %v731, 1.0614054
        %v753 = vmul.f32 %v733, 1.0614054
        %v754 = vmul.f32 %v735, 1.0614054
        %v755 = vmul.f32 %v737, 1.0614054
        %v756 = vmul.f32 %v739, 1.0614054
        %v757 = vmul.f32 %v741, 1.0614054
        %v758 = vadd.f32 %v742, -1.4531521
        %v759 = vadd.f32 %v743, -1.4531521
        %v760 = vadd.f32 %v744, -1.4531521
        %v761 = vadd.f32 %v745, -1.4531521
        %v762 = vadd.f32 %v746, -1.4531521
        %v763 = vadd.f32 %v747, -1.4531521
        %v764 = vadd.f32 %v748, -1.4531521
        %v765 = vadd.f32 %v749, -1.4531521
        %v766 = vadd.f32 %v750, -1.4531521
        %v767 = vadd.f32 %v751, -1.4531521
        %v768 = vadd.f32 %v752, -1.4531521
        %v769 = vadd.f32 %v753, -1.4531521
        %v770 = vadd.f32 %v754, -1.4531521
        %v771 = vadd.f32 %v755, -1.4531521
        %v772 = vadd.f32 %v756, -1.4531521
        %v773 = vadd.f32 %v757, -1.4531521
        %v774 = vmul.f32 %v758, %v711
        %v775 = vmul.f32 %v759, %v713
        %v776 = vmul.f32 %v760, %v715
        %v777 = vmul.f32 %v761, %v717
        %v778 = vmul.f32 %v762, %v719
        %v779 = vmul.f32 %v763, %v721
        %v780 = vmul.f32 %v764, %v723
        %v781 = vmul.f32 %v765, %v725
        %v782 = vmul.f32 %v766, %v727
        %v783 = vmul.f32 %v767, %v729
        %v784 = vmul.f32 %v768, %v731
        %v785 = vmul.f32 %v769, %v733
        %v786 = vmul.f32 %v770, %v735
        %v787 = vmul.f32 %v771, %v737
        %v788 = vmul.f32 %v772, %v739
        %v789 = vmul.f32 %v773, %v741
        %v790 = vadd.f32 %v774, 1.4214138
        %v791 = vadd.f32 %v775, 1.4214138
        %v792 = vadd.f32 %v776, 1.4214138
        %v793 = vadd.f32 %v777, 1.4214138
        %v794 = vadd.f32 %v778, 1.4214138
        %v795 = vadd.f32 %v779, 1.4214138
        %v796 = vadd.f32 %v780, 1.4214138
        %v797 = vadd.f32 %v781, 1.4214138
        %v798 = vadd.f32 %v782, 1.4214138
        %v799 = vadd.f32 %v783, 1.4214138
        %v800 = vadd.f32 %v784, 1.4214138
        %v801 = vadd.f32 %v785, 1.4214138
        %v802 = vadd.f32 %v786, 1.4214138
        %v803 = vadd.f32 %v787, 1.4214138
        %v804 = vadd.f32 %v788, 1.4214138
        %v805 = vadd.f32 %v789, 1.4214138
        %v806 = vmul.f32 %v790, %v711
        %v807 = vmul.f32 %v791, %v713
        %v808 = vmul.f32 %v792, %v715
        %v809 = vmul.f32 %v793, %v717
        %v810 = vmul.f32 %v794, %v719
        %v811 = vmul.f32 %v795, %v721
        %v812 = vmul.f32 %v796, %v723
        %v813 = vmul.f32 %v797, %v725
        %v814 = vmul.f32 %v798, %v727
        %v815 = vmul.f32 %v799, %v729
        %v816 = vmul.f32 %v800, %v731
        %v817 = vmul.f32 %v801, %v733
        %v818 = vmul.f32 %v802, %v735
        %v819 = vmul.f32 %v803, %v737
        %v820 = vmul.f32 %v804, %v739
        %v821 = vmul.f32 %v805, %v741
        %v822 = vadd.f32 %v806, -0.28449672
        %v823 = vadd.f32 %v807, -0.28449672
        %v824 = vadd.f32 %v808, -0.28449672
        %v825 = vadd.f32 %v809, -0.28449672
        %v826 = vadd.f32 %v810, -0.28449672
        %v827 = vadd.f32 %v811, -0.28449672
        %v828 = vadd.f32 %v812, -0.28449672
        %v829 = vadd.f32 %v813, -0.28449672
        %v830 = vadd.f32 %v814, -0.28449672
        %v831 = vadd.f32 %v815, -0.28449672
        %v832 = vadd.f32 %v816, -0.28449672
        %v833 = vadd.f32 %v817, -0.28449672
        %v834 = vadd.f32 %v818, -0.28449672
        %v835 = vadd.f32 %v819, -0.28449672
        %v836 = vadd.f32 %v820, -0.28449672
        %v837 = vadd.f32 %v821, -0.28449672
        %v838 = vmul.f32 %v822, %v711
        %v839 = vmul.f32 %v823, %v713
        %v840 = vmul.f32 %v824, %v715
        %v841 = vmul.f32 %v825, %v717
        %v842 = vmul.f32 %v826, %v719
        %v843 = vmul.f32 %v827, %v721
        %v844 = vmul.f32 %v828, %v723
        %v845 = vmul.f32 %v829, %v725
        %v846 = vmul.f32 %v830, %v727
        %v847 = vmul.f32 %v831, %v729
        %v848 = vmul.f32 %v832, %v731
        %v849 = vmul.f32 %v833, %v733
        %v850 = vmul.f32 %v834, %v735
        %v851 = vmul.f32 %v835, %v737
        %v852 = vmul.f32 %v836, %v739
        %v853 = vmul.f32 %v837, %v741
        %v854 = vadd.f32 %v838, 0.2548296
        %v855 = vadd.f32 %v839, 0.2548296
        %v856 = vadd.f32 %v840, 0.2548296
        %v857 = vadd.f32 %v841, 0.2548296
        %v858 = vadd.f32 %v842, 0.2548296
        %v859 = vadd.f32 %v843, 0.2548296
        %v860 = vadd.f32 %v844, 0.2548296
        %v861 = vadd.f32 %v845, 0.2548296
        %v862 = vadd.f32 %v846, 0.2548296
        %v863 = vadd.f32 %v847, 0.2548296
        %v864 = vadd.f32 %v848, 0.2548296
        %v865 = vadd.f32 %v849, 0.2548296
        %v866 = vadd.f32 %v850, 0.2548296
        %v867 = vadd.f32 %v851, 0.2548296
        %v868 = vadd.f32 %v852, 0.2548296
        %v869 = vadd.f32 %v853, 0.2548296
        %v870 = vmul.f32 %v854, %v711
        %v871 = vmul.f32 %v855, %v713
        %v872 = vmul.f32 %v856, %v715
        %v873 = vmul.f32 %v857, %v717
        %v874 = vmul.f32 %v858, %v719
        %v875 = vmul.f32 %v859, %v721
        %v876 = vmul.f32 %v860, %v723
        %v877 = vmul.f32 %v861, %v725
        %v878 = vmul.f32 %v862, %v727
        %v879 = vmul.f32 %v863, %v729
        %v880 = vmul.f32 %v864, %v731
        %v881 = vmul.f32 %v865, %v733
        %v882 = vmul.f32 %v866, %v735
        %v883 = vmul.f32 %v867, %v737
        %v884 = vmul.f32 %v868, %v739
        %v885 = vmul.f32 %v869, %v741
        %v886 = vsub.f32 0.0, %v662
        %v887 = vsub.f32 0.0, %v663
        %v888 = vsub.f32 0.0, %v664
        %v889 = vsub.f32 0.0, %v665
        %v890 = vsub.f32 0.0, %v666
        %v891 = vsub.f32 0.0, %v667
        %v892 = vsub.f32 0.0, %v668
        %v893 = vsub.f32 0.0, %v669
        %v894 = vsub.f32 0.0, %v670
        %v895 = vsub.f32 0.0, %v671
        %v896 = vsub.f32 0.0, %v672
        %v897 = vsub.f32 0.0, %v673
        %v898 = vsub.f32 0.0, %v674
        %v899 = vsub.f32 0.0, %v675
        %v900 = vsub.f32 0.0, %v676
        %v901 = vsub.f32 0.0, %v677
        %v902 = vmul.f32 %v886, %v662
        %v903 = vmul.f32 %v887, %v663
        %v904 = vmul.f32 %v888, %v664
        %v905 = vmul.f32 %v889, %v665
        %v906 = vmul.f32 %v890, %v666
        %v907 = vmul.f32 %v891, %v667
        %v908 = vmul.f32 %v892, %v668
        %v909 = vmul.f32 %v893, %v669
        %v910 = vmul.f32 %v894, %v670
        %v911 = vmul.f32 %v895, %v671
        %v912 = vmul.f32 %v896, %v672
        %v913 = vmul.f32 %v897, %v673
        %v914 = vmul.f32 %v898, %v674
        %v915 = vmul.f32 %v899, %v675
        %v916 = vmul.f32 %v900, %v676
        %v917 = vmul.f32 %v901, %v677
        %v918 = vmul.f32 %v902, 1.442695
        %v919 = vpow.pop %v918
        %v920 = vmul.f32 %v903, 1.442695
        %v921 = vpow.pop %v920
        %v922 = vmul.f32 %v904, 1.442695
        %v923 = vpow.pop %v922
        %v924 = vmul.f32 %v905, 1.442695
        %v925 = vpow.pop %v924
        %v926 = vmul.f32 %v906, 1.442695
        %v927 = vpow.pop %v926
        %v928 = vmul.f32 %v907, 1.442695
        %v929 = vpow.pop %v928
        %v930 = vmul.f32 %v908, 1.442695
        %v931 = vpow.pop %v930
        %v932 = vmul.f32 %v909, 1.442695
        %v933 = vpow.pop %v932
        %v934 = vmul.f32 %v910, 1.442695
        %v935 = vpow.pop %v934
        %v936 = vmul.f32 %v911, 1.442695
        %v937 = vpow.pop %v936
        %v938 = vmul.f32 %v912, 1.442695
        %v939 = vpow.pop %v938
        %v940 = vmul.f32 %v913, 1.442695
        %v941 = vpow.pop %v940
        %v942 = vmul.f32 %v914, 1.442695
        %v943 = vpow.pop %v942
        %v944 = vmul.f32 %v915, 1.442695
        %v945 = vpow.pop %v944
        %v946 = vmul.f32 %v916, 1.442695
        %v947 = vpow.pop %v946
        %v948 = vmul.f32 %v917, 1.442695
        %v949 = vpow.pop %v948
        %v950 = vmul.f32 %v870, %v919
        %v951 = vmul.f32 %v871, %v921
        %v952 = vmul.f32 %v872, %v923
        %v953 = vmul.f32 %v873, %v925
        %v954 = vmul.f32 %v874, %v927
        %v955 = vmul.f32 %v875, %v929
        %v956 = vmul.f32 %v876, %v931
        %v957 = vmul.f32 %v877, %v933
        %v958 = vmul.f32 %v878, %v935
        %v959 = vmul.f32 %v879, %v937
        %v960 = vmul.f32 %v880, %v939
        %v961 = vmul.f32 %v881, %v941
        %v962 = vmul.f32 %v882, %v943
        %v963 = vmul.f32 %v883, %v945
        %v964 = vmul.f32 %v884, %v947
        %v965 = vmul.f32 %v885, %v949
        %v966 = vsub.f32 1.0, %v950
        %v967 = vsub.f32 1.0, %v951
        %v968 = vsub.f32 1.0, %v952
        %v969 = vsub.f32 1.0, %v953
        %v970 = vsub.f32 1.0, %v954
        %v971 = vsub.f32 1.0, %v955
        %v972 = vsub.f32 1.0, %v956
        %v973 = vsub.f32 1.0, %v957
        %v974 = vsub.f32 1.0, %v958
        %v975 = vsub.f32 1.0, %v959
        %v976 = vsub.f32 1.0, %v960
        %v977 = vsub.f32 1.0, %v961
        %v978 = vsub.f32 1.0, %v962
        %v979 = vsub.f32 1.0, %v963
        %v980 = vsub.f32 1.0, %v964
        %v981 = vsub.f32 1.0, %v965
        %v982 = vmul.f32 %v646, %v966
        %v983 = vmul.f32 %v647, %v967
        %v984 = vmul.f32 %v648, %v968
        %v985 = vmul.f32 %v649, %v969
        %v986 = vmul.f32 %v650, %v970
        %v987 = vmul.f32 %v651, %v971
        %v988 = vmul.f32 %v652, %v972
        %v989 = vmul.f32 %v653, %v973
        %v990 = vmul.f32 %v654, %v974
        %v991 = vmul.f32 %v655, %v975
        %v992 = vmul.f32 %v656, %v976
        %v993 = vmul.f32 %v657, %v977
        %v994 = vmul.f32 %v658, %v978
        %v995 = vmul.f32 %v659, %v979
        %v996 = vmul.f32 %v660, %v980
        %v997 = vmul.f32 %v661, %v981
        %v998 = vadd.f32 %v982, 1.0
        %v999 = vadd.f32 %v983, 1.0
        %v1000 = vadd.f32 %v984, 1.0
        %v1001 = vadd.f32 %v985, 1.0
        %v1002 = vadd.f32 %v986, 1.0
        %v1003 = vadd.f32 %v987, 1.0
        %v1004 = vadd.f32 %v988, 1.0
        %v1005 = vadd.f32 %v989, 1.0
        %v1006 = vadd.f32 %v990, 1.0
        %v1007 = vadd.f32 %v991, 1.0
        %v1008 = vadd.f32 %v992, 1.0
        %v1009 = vadd.f32 %v993, 1.0
        %v1010 = vadd.f32 %v994, 1.0
        %v1011 = vadd.f32 %v995, 1.0
        %v1012 = vadd.f32 %v996, 1.0
        %v1013 = vadd.f32 %v997, 1.0
        %v1014 = vmul.f32 %v598, %v998
        %v1015 = vmul.f32 %v599, %v999
        %v1016 = vmul.f32 %v600, %v1000
        %v1017 = vmul.f32 %v601, %v1001
        %v1018 = vmul.f32 %v602, %v1002
        %v1019 = vmul.f32 %v603, %v1003
        %v1020 = vmul.f32 %v604, %v1004
        %v1021 = vmul.f32 %v605, %v1005
        %v1022 = vmul.f32 %v606, %v1006
        %v1023 = vmul.f32 %v607, %v1007
        %v1024 = vmul.f32 %v608, %v1008
        %v1025 = vmul.f32 %v609, %v1009
        %v1026 = vmul.f32 %v610, %v1010
        %v1027 = vmul.f32 %v611, %v1011
        %v1028 = vmul.f32 %v612, %v1012
        %v1029 = vmul.f32 %v613, %v1013
        %v1030 = vpack.c.bf16 %v234, %v233
        %v1031 = vunpack.c.l.bf16 %v1030
        %v1032 = vunpack.c.h.bf16 %v1030
        %v1033 = vsub.f32 %v233, %v1031
        %v1034 = vsub.f32 %v234, %v1032
        %v1035 = vpack.c.bf16 %v1034, %v1033
        %v1036 = vpack.c.bf16 %v1016, %v1014
        %v1037 = vpack.c.bf16 %v1017, %v1015
        %v1038 = vpack.c.bf16 %v1020, %v1018
        %v1039 = vpack.c.bf16 %v1021, %v1019
        %v1040 = vpack.c.bf16 %v1024, %v1022
        %v1041 = vpack.c.bf16 %v1025, %v1023
        %v1042 = vpack.c.bf16 %v1028, %v1026
        %v1043 = vpack.c.bf16 %v1029, %v1027
        %v1044 = vunpack.c.l.bf16 %v1036
        %v1045 = vunpack.c.l.bf16 %v1037
        %v1046 = vunpack.c.h.bf16 %v1036
        %v1047 = vunpack.c.h.bf16 %v1037
        %v1048 = vunpack.c.l.bf16 %v1038
        %v1049 = vunpack.c.l.bf16 %v1039
        %v1050 = vunpack.c.h.bf16 %v1038
        %v1051 = vunpack.c.h.bf16 %v1039
        %v1052 = vunpack.c.l.bf16 %v1040
        %v1053 = vunpack.c.l.bf16 %v1041
        %v1054 = vunpack.c.h.bf16 %v1040
        %v1055 = vunpack.c.h.bf16 %v1041
        %v1056 = vunpack.c.l.bf16 %v1042
        %v1057 = vunpack.c.l.bf16 %v1043
        %v1058 = vunpack.c.h.bf16 %v1042
        %v1059 = vunpack.c.h.bf16 %v1043
        %v1060 = vsub.f32 %v1014, %v1044
        %v1061 = vsub.f32 %v1015, %v1045
        %v1062 = vsub.f32 %v1016, %v1046
        %v1063 = vsub.f32 %v1017, %v1047
        %v1064 = vsub.f32 %v1018, %v1048
        %v1065 = vsub.f32 %v1019, %v1049
        %v1066 = vsub.f32 %v1020, %v1050
        %v1067 = vsub.f32 %v1021, %v1051
        %v1068 = vsub.f32 %v1022, %v1052
        %v1069 = vsub.f32 %v1023, %v1053
        %v1070 = vsub.f32 %v1024, %v1054
        %v1071 = vsub.f32 %v1025, %v1055
        %v1072 = vsub.f32 %v1026, %v1056
        %v1073 = vsub.f32 %v1027, %v1057
        %v1074 = vsub.f32 %v1028, %v1058
        %v1075 = vsub.f32 %v1029, %v1059
        %v1076 = vpack.c.bf16 %v1062, %v1060
        %v1077 = vpack.c.bf16 %v1063, %v1061
        %v1078 = vpack.c.bf16 %v1066, %v1064
        %v1079 = vpack.c.bf16 %v1067, %v1065
        %v1080 = vpack.c.bf16 %v1070, %v1068
        %v1081 = vpack.c.bf16 %v1071, %v1069
        %v1082 = vpack.c.bf16 %v1074, %v1072
        %v1083 = vpack.c.bf16 %v1075, %v1073
        %1085 = vrot.lane.b32.xlu0 %v1030, 120
        %v1086 = vpop.permute.xlu0 %1085
        %vm1087 = vcmask 523264
        %v1089 = vsel %vm1087, %v1086, 0
        %1091 = vmatprep.subr.bf16.mxu0 0
        %1092 = vmatpush1.bf16.msra.mxu0 0
        %1093 = vmatprep.subr.bf16.mxu0 0
        %1094 = vmatpush1.bf16.msra.mxu0 0
        %1095 = vmatprep.subr.bf16.mxu0 0
        %1096 = vmatpush1.bf16.msra.mxu0 0
        %1097 = vmatprep.subr.bf16.mxu0 0
        %1098 = vmatpush1.bf16.msra.mxu0 0
        %1099 = vmatprep.subr.bf16.mxu0 %v1083
        %1100 = vmatpush1.bf16.msra.mxu0 %v1082
        %1101 = vmatprep.subr.bf16.mxu0 %v1081
        %1102 = vmatpush1.bf16.msra.mxu0 %v1080
        %1103 = vmatprep.subr.bf16.mxu0 %v1079
        %1104 = vmatpush1.bf16.msra.mxu0 %v1078
        %1105 = vmatprep.subr.bf16.mxu0 %v1077
        %1106 = vmatpush1.bf16.msra.mxu0 %v1076
        %1107 = vmatprep.subr.bf16.mxu0 0
        %1108 = vmatpush2.bf16.msra.mxu0 0
        %1109 = vmatprep.subr.bf16.mxu0 0
        %1110 = vmatpush2.bf16.msra.mxu0 0
        %1111 = vmatprep.subr.bf16.mxu0 0
        %1112 = vmatpush2.bf16.msra.mxu0 0
        %1113 = vmatprep.subr.bf16.mxu0 0
        %1114 = vmatpush2.bf16.msra.mxu0 0
        %1115 = vmatprep.subr.bf16.mxu0 0
        %1116 = vmatpush2.bf16.msra.mxu0 0
        %1117 = vmatprep.subr.bf16.mxu0 0
        %1118 = vmatpush2.bf16.msra.mxu0 0
        %1119 = vmatprep.subr.bf16.mxu0 0
        %1120 = vmatpush2.bf16.msra.mxu0 0
        %1121 = vmatprep.subr.bf16.mxu0 0
        %1122 = vmatpush2.bf16.msra.mxu0 0
        %1123 = vmatprep.mubr.bf16.mxu0 0
        %1124 = vmatmul.mubr.bf16.gmra.mxu0 %v1089
        %v1125 = vpop.f32.mrf.mxu0
        %v1126 = vadd.f32 0.0, %v1125
        %v1127 = vpop.f32.mrf.mxu0
        %v1128 = vadd.f32 0.0, %v1127
        %v1129 = vpop.f32.mrf.mxu0
        %v1130 = vadd.f32 0.0, %v1129
        %v1131 = vpop.f32.mrf.mxu0
        %v1132 = vadd.f32 0.0, %v1131
        %1133 = vdwg.mxu0
        %1134 = vmatprep.subr.bf16.mxu0 0
        %1135 = vmatpush1.bf16.msra.mxu0 0
        %1136 = vmatprep.subr.bf16.mxu0 0
        %1137 = vmatpush1.bf16.msra.mxu0 0
        %1138 = vmatprep.subr.bf16.mxu0 0
        %1139 = vmatpush1.bf16.msra.mxu0 0
        %1140 = vmatprep.subr.bf16.mxu0 0
        %1141 = vmatpush1.bf16.msra.mxu0 0
        %1142 = vmatprep.subr.bf16.mxu0 %v1043
        %1143 = vmatpush1.bf16.msra.mxu0 %v1042
        %1144 = vmatprep.subr.bf16.mxu0 %v1041
        %1145 = vmatpush1.bf16.msra.mxu0 %v1040
        %1146 = vmatprep.subr.bf16.mxu0 %v1039
        %1147 = vmatpush1.bf16.msra.mxu0 %v1038
        %1148 = vmatprep.subr.bf16.mxu0 %v1037
        %1149 = vmatpush1.bf16.msra.mxu0 %v1036
        %1150 = vmatprep.subr.bf16.mxu0 0
        %1151 = vmatpush2.bf16.msra.mxu0 0
        %1152 = vmatprep.subr.bf16.mxu0 0
        %1153 = vmatpush2.bf16.msra.mxu0 0
        %1154 = vmatprep.subr.bf16.mxu0 0
        %1155 = vmatpush2.bf16.msra.mxu0 0
        %1156 = vmatprep.subr.bf16.mxu0 0
        %1157 = vmatpush2.bf16.msra.mxu0 0
        %1158 = vmatprep.subr.bf16.mxu0 0
        %1159 = vmatpush2.bf16.msra.mxu0 0
        %1160 = vmatprep.subr.bf16.mxu0 0
        %1161 = vmatpush2.bf16.msra.mxu0 0
        %1162 = vmatprep.subr.bf16.mxu0 0
        %1163 = vmatpush2.bf16.msra.mxu0 0
        %1164 = vmatprep.subr.bf16.mxu0 0
        %1165 = vmatpush2.bf16.msra.mxu0 0
        %1166 = vmatprep.mubr.bf16.mxu0 0
        %1167 = vmatmul.mubr.bf16.gmra.mxu0 %v1089
        %v1168 = vpop.f32.mrf.mxu0
        %v1169 = vadd.f32 %v1126, %v1168
        %v1170 = vpop.f32.mrf.mxu0
        %v1171 = vadd.f32 %v1128, %v1170
        %v1172 = vpop.f32.mrf.mxu0
        %v1173 = vadd.f32 %v1130, %v1172
        %v1174 = vpop.f32.mrf.mxu0
        %v1175 = vadd.f32 %v1132, %v1174
        %1176 = vdwg.mxu0
        %1178 = vrot.lane.b32.xlu0 %v1035, 120
        %v1179 = vpop.permute.xlu0 %1178
        %v1181 = vsel %vm1087, %v1179, 0
        %1183 = vmatprep.subr.bf16.mxu0 0
        %1184 = vmatpush1.bf16.msra.mxu0 0
        %1185 = vmatprep.subr.bf16.mxu0 0
        %1186 = vmatpush1.bf16.msra.mxu0 0
        %1187 = vmatprep.subr.bf16.mxu0 0
        %1188 = vmatpush1.bf16.msra.mxu0 0
        %1189 = vmatprep.subr.bf16.mxu0 0
        %1190 = vmatpush1.bf16.msra.mxu0 0
        %1191 = vmatprep.subr.bf16.mxu0 %v1043
        %1192 = vmatpush1.bf16.msra.mxu0 %v1042
        %1193 = vmatprep.subr.bf16.mxu0 %v1041
        %1194 = vmatpush1.bf16.msra.mxu0 %v1040
        %1195 = vmatprep.subr.bf16.mxu0 %v1039
        %1196 = vmatpush1.bf16.msra.mxu0 %v1038
        %1197 = vmatprep.subr.bf16.mxu0 %v1037
        %1198 = vmatpush1.bf16.msra.mxu0 %v1036
        %1199 = vmatprep.subr.bf16.mxu0 0
        %1200 = vmatpush2.bf16.msra.mxu0 0
        %1201 = vmatprep.subr.bf16.mxu0 0
        %1202 = vmatpush2.bf16.msra.mxu0 0
        %1203 = vmatprep.subr.bf16.mxu0 0
        %1204 = vmatpush2.bf16.msra.mxu0 0
        %1205 = vmatprep.subr.bf16.mxu0 0
        %1206 = vmatpush2.bf16.msra.mxu0 0
        %1207 = vmatprep.subr.bf16.mxu0 0
        %1208 = vmatpush2.bf16.msra.mxu0 0
        %1209 = vmatprep.subr.bf16.mxu0 0
        %1210 = vmatpush2.bf16.msra.mxu0 0
        %1211 = vmatprep.subr.bf16.mxu0 0
        %1212 = vmatpush2.bf16.msra.mxu0 0
        %1213 = vmatprep.subr.bf16.mxu0 0
        %1214 = vmatpush2.bf16.msra.mxu0 0
        %1215 = vmatprep.mubr.bf16.mxu0 0
        %1216 = vmatmul.mubr.bf16.gmra.mxu0 %v1181
        %v1217 = vpop.f32.mrf.mxu0
        %v1218 = vadd.f32 0.0, %v1217
        %v1219 = vpop.f32.mrf.mxu0
        %v1220 = vadd.f32 0.0, %v1219
        %v1221 = vpop.f32.mrf.mxu0
        %v1222 = vadd.f32 0.0, %v1221
        %v1223 = vpop.f32.mrf.mxu0
        %v1224 = vadd.f32 0.0, %v1223
        %1225 = vdwg.mxu0
        %v1226 = vadd.f32 %v1169, %v1218
        %v1227 = vadd.f32 %v1171, %v1220
        %v1228 = vadd.f32 %v1173, %v1222
        %v1229 = vadd.f32 %v1175, %v1224
        %1231 = vset.pattern.permute.xlu0 73
        %1232 = vperm.xlu0 %1231, %v233
        %v1233 = vpop.permute.xlu0 %1232
        %1236 = vset.pattern.permute.xlu0 73
        %1237 = vperm.xlu0 %1236, %v234
        %v1238 = vpop.permute.xlu0 %1237
        %v1240 = vadd.f32 %v1226, %v1233
        %v1241 = vadd.f32 %v1227, %v1233
        %v1242 = vadd.f32 %v1228, %v1238
        %v1243 = vadd.f32 %v1229, %v1238
        %v1244 = vstv %s217
        %v1245 = vmul.f32 %v1244, %v235
        %v1246 = vmul.f32 %v1244, %v236
        %v1247 = vstv %s218
        %v1248 = vadd.f32 %v1245, %v1247
        %v1249 = vadd.f32 %v1246, %v1247
        %v1250 = vstv %s219
        %v1251 = vmul.f32 %v1250, %v235
        %v1252 = vmul.f32 %v1250, %v236
        %v1253 = vstv %s220
        %v1254 = vadd.f32 %v1251, %v1253
        %v1255 = vadd.f32 %v1252, %v1253
        %v1256 = vstv %s221
        %v1257 = vmul.f32 %v1256, %v235
        %v1258 = vmul.f32 %v1256, %v236
        %v1259 = vstv %s222
        %v1260 = vadd.f32 %v1257, %v1259
        %v1261 = vadd.f32 %v1258, %v1259
        %v1262 = vmax.f32 %v1260, 0.0
        %v1263 = vmax.f32 %v1261, 0.0
        %v1264 = vmul.f32 %v1240, %v1254
        %v1265 = vmul.f32 %v1241, %v1255
        %v1266 = vrot.slane %v1264, 4
        %v1267 = vadd.f32 %v1264, %v1266
        %v1268 = vrot.slane %v1267, 2
        %v1269 = vadd.f32 %v1267, %v1268
        %v1270 = vrot.slane %v1269, 1
        %v1271 = vadd.f32 %v1269, %v1270
        %v1272 = vrot.slane %v1265, 4
        %v1273 = vadd.f32 %v1265, %v1272
        %v1274 = vrot.slane %v1273, 2
        %v1275 = vadd.f32 %v1273, %v1274
        %v1276 = vrot.slane %v1275, 1
        %v1277 = vadd.f32 %v1275, %v1276
        %v1278 = vmul.f32 %v1271, %v1254
        %v1279 = vmul.f32 %v1277, %v1255
        %v1280 = vmul.f32 %v1240, %v1248
        %v1281 = vmul.f32 %v1241, %v1249
        %v1282 = vlaneseq
        %v1283 = vshrl.u32 %v1282, 7
        %v1284 = vsub.s32 0, %v1283
        %v1285 = vrot.slane %v1248, %v1284
        %v1286 = vlaneseq
        %v1287 = vshrl.u32 %v1286, 7
        %v1288 = vsub.s32 0, %v1287
        %v1289 = vrot.slane %v1249, %v1288
        %v1290 = vmul.f32 %v1280, %v1285
        %v1291 = vmul.f32 %v1281, %v1289
        %v1292 = vadd.f32 %v1278, %v1290
        %v1293 = vadd.f32 %v1279, %v1291
        %v1294 = vlaneseq
        %v1295 = vshrl.u32 %v1294, 7
        %v1296 = vsub.s32 0, %v1295
        %v1297 = vrot.slane %v1242, %v1296
        %v1298 = vlaneseq
        %v1299 = vshrl.u32 %v1298, 7
        %v1300 = vsub.s32 0, %v1299
        %v1301 = vrot.slane %v1243, %v1300
        %v1302 = vmul.f32 %v1297, %v1292
        %v1303 = vmul.f32 %v1301, %v1293
        %v1304 = vlaneseq
        %v1305 = vshrl.u32 %v1304, 7
        %v1306 = vsub.s32 1, %v1305
        %v1307 = vrot.slane %v1248, %v1306
        %v1308 = vlaneseq
        %v1309 = vshrl.u32 %v1308, 7
        %v1310 = vsub.s32 1, %v1309
        %v1311 = vrot.slane %v1249, %v1310
        %v1312 = vmul.f32 %v1280, %v1307
        %v1313 = vmul.f32 %v1281, %v1311
        %v1314 = vadd.f32 %v1278, %v1312
        %v1315 = vadd.f32 %v1279, %v1313
        %v1316 = vlaneseq
        %v1317 = vshrl.u32 %v1316, 7
        %v1318 = vsub.s32 1, %v1317
        %v1319 = vrot.slane %v1242, %v1318
        %v1320 = vlaneseq
        %v1321 = vshrl.u32 %v1320, 7
        %v1322 = vsub.s32 1, %v1321
        %v1323 = vrot.slane %v1243, %v1322
        %v1324 = vmul.f32 %v1319, %v1314
        %v1325 = vmul.f32 %v1323, %v1315
        %v1326 = vmax.f32 %v1302, %v1324
        %v1327 = vmax.f32 %v1303, %v1325
        %v1328 = vlaneseq
        %v1329 = vshrl.u32 %v1328, 7
        %v1330 = vsub.s32 2, %v1329
        %v1331 = vrot.slane %v1248, %v1330
        %v1332 = vlaneseq
        %v1333 = vshrl.u32 %v1332, 7
        %v1334 = vsub.s32 2, %v1333
        %v1335 = vrot.slane %v1249, %v1334
        %v1336 = vmul.f32 %v1280, %v1331
        %v1337 = vmul.f32 %v1281, %v1335
        %v1338 = vadd.f32 %v1278, %v1336
        %v1339 = vadd.f32 %v1279, %v1337
        %v1340 = vlaneseq
        %v1341 = vshrl.u32 %v1340, 7
        %v1342 = vsub.s32 2, %v1341
        %v1343 = vrot.slane %v1242, %v1342
        %v1344 = vlaneseq
        %v1345 = vshrl.u32 %v1344, 7
        %v1346 = vsub.s32 2, %v1345
        %v1347 = vrot.slane %v1243, %v1346
        %v1348 = vmul.f32 %v1343, %v1338
        %v1349 = vmul.f32 %v1347, %v1339
        %v1350 = vmax.f32 %v1326, %v1348
        %v1351 = vmax.f32 %v1327, %v1349
        %v1352 = vlaneseq
        %v1353 = vshrl.u32 %v1352, 7
        %v1354 = vsub.s32 3, %v1353
        %v1355 = vrot.slane %v1248, %v1354
        %v1356 = vlaneseq
        %v1357 = vshrl.u32 %v1356, 7
        %v1358 = vsub.s32 3, %v1357
        %v1359 = vrot.slane %v1249, %v1358
        %v1360 = vmul.f32 %v1280, %v1355
        %v1361 = vmul.f32 %v1281, %v1359
        %v1362 = vadd.f32 %v1278, %v1360
        %v1363 = vadd.f32 %v1279, %v1361
        %v1364 = vlaneseq
        %v1365 = vshrl.u32 %v1364, 7
        %v1366 = vsub.s32 3, %v1365
        %v1367 = vrot.slane %v1242, %v1366
        %v1368 = vlaneseq
        %v1369 = vshrl.u32 %v1368, 7
        %v1370 = vsub.s32 3, %v1369
        %v1371 = vrot.slane %v1243, %v1370
        %v1372 = vmul.f32 %v1367, %v1362
        %v1373 = vmul.f32 %v1371, %v1363
        %v1374 = vmax.f32 %v1350, %v1372
        %v1375 = vmax.f32 %v1351, %v1373
        %v1376 = vlaneseq
        %v1377 = vshrl.u32 %v1376, 7
        %v1378 = vsub.s32 4, %v1377
        %v1379 = vrot.slane %v1248, %v1378
        %v1380 = vlaneseq
        %v1381 = vshrl.u32 %v1380, 7
        %v1382 = vsub.s32 4, %v1381
        %v1383 = vrot.slane %v1249, %v1382
        %v1384 = vmul.f32 %v1280, %v1379
        %v1385 = vmul.f32 %v1281, %v1383
        %v1386 = vadd.f32 %v1278, %v1384
        %v1387 = vadd.f32 %v1279, %v1385
        %v1388 = vlaneseq
        %v1389 = vshrl.u32 %v1388, 7
        %v1390 = vsub.s32 4, %v1389
        %v1391 = vrot.slane %v1242, %v1390
        %v1392 = vlaneseq
        %v1393 = vshrl.u32 %v1392, 7
        %v1394 = vsub.s32 4, %v1393
        %v1395 = vrot.slane %v1243, %v1394
        %v1396 = vmul.f32 %v1391, %v1386
        %v1397 = vmul.f32 %v1395, %v1387
        %v1398 = vmax.f32 %v1374, %v1396
        %v1399 = vmax.f32 %v1375, %v1397
        %v1400 = vlaneseq
        %v1401 = vshrl.u32 %v1400, 7
        %v1402 = vsub.s32 5, %v1401
        %v1403 = vrot.slane %v1248, %v1402
        %v1404 = vlaneseq
        %v1405 = vshrl.u32 %v1404, 7
        %v1406 = vsub.s32 5, %v1405
        %v1407 = vrot.slane %v1249, %v1406
        %v1408 = vmul.f32 %v1280, %v1403
        %v1409 = vmul.f32 %v1281, %v1407
        %v1410 = vadd.f32 %v1278, %v1408
        %v1411 = vadd.f32 %v1279, %v1409
        %v1412 = vlaneseq
        %v1413 = vshrl.u32 %v1412, 7
        %v1414 = vsub.s32 5, %v1413
        %v1415 = vrot.slane %v1242, %v1414
        %v1416 = vlaneseq
        %v1417 = vshrl.u32 %v1416, 7
        %v1418 = vsub.s32 5, %v1417
        %v1419 = vrot.slane %v1243, %v1418
        %v1420 = vmul.f32 %v1415, %v1410
        %v1421 = vmul.f32 %v1419, %v1411
        %v1422 = vmax.f32 %v1398, %v1420
        %v1423 = vmax.f32 %v1399, %v1421
        %v1424 = vlaneseq
        %v1425 = vshrl.u32 %v1424, 7
        %v1426 = vsub.s32 6, %v1425
        %v1427 = vrot.slane %v1248, %v1426
        %v1428 = vlaneseq
        %v1429 = vshrl.u32 %v1428, 7
        %v1430 = vsub.s32 6, %v1429
        %v1431 = vrot.slane %v1249, %v1430
        %v1432 = vmul.f32 %v1280, %v1427
        %v1433 = vmul.f32 %v1281, %v1431
        %v1434 = vadd.f32 %v1278, %v1432
        %v1435 = vadd.f32 %v1279, %v1433
        %v1436 = vlaneseq
        %v1437 = vshrl.u32 %v1436, 7
        %v1438 = vsub.s32 6, %v1437
        %v1439 = vrot.slane %v1242, %v1438
        %v1440 = vlaneseq
        %v1441 = vshrl.u32 %v1440, 7
        %v1442 = vsub.s32 6, %v1441
        %v1443 = vrot.slane %v1243, %v1442
        %v1444 = vmul.f32 %v1439, %v1434
        %v1445 = vmul.f32 %v1443, %v1435
        %v1446 = vmax.f32 %v1422, %v1444
        %v1447 = vmax.f32 %v1423, %v1445
        %v1448 = vlaneseq
        %v1449 = vshrl.u32 %v1448, 7
        %v1450 = vsub.s32 7, %v1449
        %v1451 = vrot.slane %v1248, %v1450
        %v1452 = vlaneseq
        %v1453 = vshrl.u32 %v1452, 7
        %v1454 = vsub.s32 7, %v1453
        %v1455 = vrot.slane %v1249, %v1454
        %v1456 = vmul.f32 %v1280, %v1451
        %v1457 = vmul.f32 %v1281, %v1455
        %v1458 = vadd.f32 %v1278, %v1456
        %v1459 = vadd.f32 %v1279, %v1457
        %v1460 = vlaneseq
        %v1461 = vshrl.u32 %v1460, 7
        %v1462 = vsub.s32 7, %v1461
        %v1463 = vrot.slane %v1242, %v1462
        %v1464 = vlaneseq
        %v1465 = vshrl.u32 %v1464, 7
        %v1466 = vsub.s32 7, %v1465
        %v1467 = vrot.slane %v1243, %v1466
        %v1468 = vmul.f32 %v1463, %v1458
        %v1469 = vmul.f32 %v1467, %v1459
        %v1470 = vmax.f32 %v1446, %v1468
        %v1471 = vmax.f32 %v1447, %v1469
        %v1472 = vsub.f32 %v1302, %v1470
        %v1473 = vsub.f32 %v1303, %v1471
        %v1474 = vmul.f32 %v1472, 1.442695
        %v1475 = vpow.pop %v1474
        %v1476 = vmul.f32 %v1473, 1.442695
        %v1477 = vpow.pop %v1476
        %v1478 = vadd.f32 %v1475, 0.0
        %v1479 = vadd.f32 %v1477, 0.0
        %v1480 = vlaneseq
        %v1481 = vshrl.u32 %v1480, 7
        %v1482 = vsub.s32 0, %v1481
        %v1483 = vrot.slane %v1262, %v1482
        %v1484 = vlaneseq
        %v1485 = vshrl.u32 %v1484, 7
        %v1486 = vsub.s32 0, %v1485
        %v1487 = vrot.slane %v1263, %v1486
        %v1488 = vmul.f32 %v1483, %v1475
        %v1489 = vmul.f32 %v1487, %v1477
        %v1490 = vadd.f32 %v1488, 0.0
        %v1491 = vadd.f32 %v1489, 0.0
        %v1492 = vsub.f32 %v1324, %v1470
        %v1493 = vsub.f32 %v1325, %v1471
        %v1494 = vmul.f32 %v1492, 1.442695
        %v1495 = vpow.pop %v1494
        %v1496 = vmul.f32 %v1493, 1.442695
        %v1497 = vpow.pop %v1496
        %v1498 = vadd.f32 %v1478, %v1495
        %v1499 = vadd.f32 %v1479, %v1497
        %v1500 = vlaneseq
        %v1501 = vshrl.u32 %v1500, 7
        %v1502 = vsub.s32 1, %v1501
        %v1503 = vrot.slane %v1262, %v1502
        %v1504 = vlaneseq
        %v1505 = vshrl.u32 %v1504, 7
        %v1506 = vsub.s32 1, %v1505
        %v1507 = vrot.slane %v1263, %v1506
        %v1508 = vmul.f32 %v1503, %v1495
        %v1509 = vmul.f32 %v1507, %v1497
        %v1510 = vadd.f32 %v1490, %v1508
        %v1511 = vadd.f32 %v1491, %v1509
        %v1512 = vsub.f32 %v1348, %v1470
        %v1513 = vsub.f32 %v1349, %v1471
        %v1514 = vmul.f32 %v1512, 1.442695
        %v1515 = vpow.pop %v1514
        %v1516 = vmul.f32 %v1513, 1.442695
        %v1517 = vpow.pop %v1516
        %v1518 = vadd.f32 %v1498, %v1515
        %v1519 = vadd.f32 %v1499, %v1517
        %v1520 = vlaneseq
        %v1521 = vshrl.u32 %v1520, 7
        %v1522 = vsub.s32 2, %v1521
        %v1523 = vrot.slane %v1262, %v1522
        %v1524 = vlaneseq
        %v1525 = vshrl.u32 %v1524, 7
        %v1526 = vsub.s32 2, %v1525
        %v1527 = vrot.slane %v1263, %v1526
        %v1528 = vmul.f32 %v1523, %v1515
        %v1529 = vmul.f32 %v1527, %v1517
        %v1530 = vadd.f32 %v1510, %v1528
        %v1531 = vadd.f32 %v1511, %v1529
        %v1532 = vsub.f32 %v1372, %v1470
        %v1533 = vsub.f32 %v1373, %v1471
        %v1534 = vmul.f32 %v1532, 1.442695
        %v1535 = vpow.pop %v1534
        %v1536 = vmul.f32 %v1533, 1.442695
        %v1537 = vpow.pop %v1536
        %v1538 = vadd.f32 %v1518, %v1535
        %v1539 = vadd.f32 %v1519, %v1537
        %v1540 = vlaneseq
        %v1541 = vshrl.u32 %v1540, 7
        %v1542 = vsub.s32 3, %v1541
        %v1543 = vrot.slane %v1262, %v1542
        %v1544 = vlaneseq
        %v1545 = vshrl.u32 %v1544, 7
        %v1546 = vsub.s32 3, %v1545
        %v1547 = vrot.slane %v1263, %v1546
        %v1548 = vmul.f32 %v1543, %v1535
        %v1549 = vmul.f32 %v1547, %v1537
        %v1550 = vadd.f32 %v1530, %v1548
        %v1551 = vadd.f32 %v1531, %v1549
        %v1552 = vsub.f32 %v1396, %v1470
        %v1553 = vsub.f32 %v1397, %v1471
        %v1554 = vmul.f32 %v1552, 1.442695
        %v1555 = vpow.pop %v1554
        %v1556 = vmul.f32 %v1553, 1.442695
        %v1557 = vpow.pop %v1556
        %v1558 = vadd.f32 %v1538, %v1555
        %v1559 = vadd.f32 %v1539, %v1557
        %v1560 = vlaneseq
        %v1561 = vshrl.u32 %v1560, 7
        %v1562 = vsub.s32 4, %v1561
        %v1563 = vrot.slane %v1262, %v1562
        %v1564 = vlaneseq
        %v1565 = vshrl.u32 %v1564, 7
        %v1566 = vsub.s32 4, %v1565
        %v1567 = vrot.slane %v1263, %v1566
        %v1568 = vmul.f32 %v1563, %v1555
        %v1569 = vmul.f32 %v1567, %v1557
        %v1570 = vadd.f32 %v1550, %v1568
        %v1571 = vadd.f32 %v1551, %v1569
        %v1572 = vsub.f32 %v1420, %v1470
        %v1573 = vsub.f32 %v1421, %v1471
        %v1574 = vmul.f32 %v1572, 1.442695
        %v1575 = vpow.pop %v1574
        %v1576 = vmul.f32 %v1573, 1.442695
        %v1577 = vpow.pop %v1576
        %v1578 = vadd.f32 %v1558, %v1575
        %v1579 = vadd.f32 %v1559, %v1577
        %v1580 = vlaneseq
        %v1581 = vshrl.u32 %v1580, 7
        %v1582 = vsub.s32 5, %v1581
        %v1583 = vrot.slane %v1262, %v1582
        %v1584 = vlaneseq
        %v1585 = vshrl.u32 %v1584, 7
        %v1586 = vsub.s32 5, %v1585
        %v1587 = vrot.slane %v1263, %v1586
        %v1588 = vmul.f32 %v1583, %v1575
        %v1589 = vmul.f32 %v1587, %v1577
        %v1590 = vadd.f32 %v1570, %v1588
        %v1591 = vadd.f32 %v1571, %v1589
        %v1592 = vsub.f32 %v1444, %v1470
        %v1593 = vsub.f32 %v1445, %v1471
        %v1594 = vmul.f32 %v1592, 1.442695
        %v1595 = vpow.pop %v1594
        %v1596 = vmul.f32 %v1593, 1.442695
        %v1597 = vpow.pop %v1596
        %v1598 = vadd.f32 %v1578, %v1595
        %v1599 = vadd.f32 %v1579, %v1597
        %v1600 = vlaneseq
        %v1601 = vshrl.u32 %v1600, 7
        %v1602 = vsub.s32 6, %v1601
        %v1603 = vrot.slane %v1262, %v1602
        %v1604 = vlaneseq
        %v1605 = vshrl.u32 %v1604, 7
        %v1606 = vsub.s32 6, %v1605
        %v1607 = vrot.slane %v1263, %v1606
        %v1608 = vmul.f32 %v1603, %v1595
        %v1609 = vmul.f32 %v1607, %v1597
        %v1610 = vadd.f32 %v1590, %v1608
        %v1611 = vadd.f32 %v1591, %v1609
        %v1612 = vsub.f32 %v1468, %v1470
        %v1613 = vsub.f32 %v1469, %v1471
        %v1614 = vmul.f32 %v1612, 1.442695
        %v1615 = vpow.pop %v1614
        %v1616 = vmul.f32 %v1613, 1.442695
        %v1617 = vpow.pop %v1616
        %v1618 = vadd.f32 %v1598, %v1615
        %v1619 = vadd.f32 %v1599, %v1617
        %v1620 = vlaneseq
        %v1621 = vshrl.u32 %v1620, 7
        %v1622 = vsub.s32 7, %v1621
        %v1623 = vrot.slane %v1262, %v1622
        %v1624 = vlaneseq
        %v1625 = vshrl.u32 %v1624, 7
        %v1626 = vsub.s32 7, %v1625
        %v1627 = vrot.slane %v1263, %v1626
        %v1628 = vmul.f32 %v1623, %v1615
        %v1629 = vmul.f32 %v1627, %v1617
        %v1630 = vadd.f32 %v1610, %v1628
        %v1631 = vadd.f32 %v1611, %v1629
        %v1632 = vrcp.pop %v1618
        %v1633 = vrcp.pop %v1619
        %v1634 = vmul.f32 %v1618, %v1632
        %v1635 = vmul.f32 %v1619, %v1633
        %v1636 = vsub.f32 2.0, %v1634
        %v1637 = vsub.f32 2.0, %v1635
        %v1638 = vmul.f32 %v1632, %v1636
        %v1639 = vmul.f32 %v1633, %v1637
        %v1640 = vmul.f32 %v1630, %v1638
        %v1641 = vmul.f32 %v1631, %v1639
        %v1642 = vstv %s223
        %v1643 = vmul.f32 %v1642, %v1640
        %v1644 = vmul.f32 %v1642, %v1641
        %v1645 = vstv %s224
        %v1646 = vadd.f32 %v1643, %v1645
        %v1647 = vadd.f32 %v1644, %v1645
        %v1648 = vmax.f32 %v1646, 0.0
        %v1649 = vmax.f32 %v1647, 0.0
        %v1650 = vadd.f32 %v1648, %v1262
        %v1651 = vadd.f32 %v1649, %v1263
        %1652 = vst [vmem:[%s213] sm:$0xff] %v1650
        %1653 = vst [vmem:[%s213 + $0x8] sm:$0xff] %v1651
        %s1654 = sand.u32 %s98, 1
        %s1655 = scalar_lea.sflag [#allocation4], %s1654
        %s1656 = sand.u32 %s98, 1
        %s1657 = smul.addr %s1656, 16
        %s1658 = scalar_lea.vmem [#allocation9], %s1657
        // Predicated region
        $region45: #{tpu_custom_call.1} parent=31 // pred_check
          %p1659 = pneg %p108
        $region46: #{tpu_custom_call.1} parent=31 // pred_check_branch
          %1661 = sbr.rel (%p1659) target = $region48
        $region47: #{tpu_custom_call.1} parent=31 // pred_region
          %s1662 = smul.u32 2, %s22
          %s1664 = ssub.s32 256, 256
          %1665 = vsyncadd %s1655, %s1664
          %s1666 = smul.addr %s1662, 128
          %s1667 = scalar_lea.hbm %s3, %s1666
          %s1669 = sshll.u32 %s1658, 4
          %s1670 = int_to_ptr.vmem [resolvable:$true] %s1669
          %1672 = dma.vmem_to_hbm [thread:$0]  %s1670, 256, %s1667, %s1655
        $region48: #{tpu_custom_call.1} parent=31 // pred_fallthru
          _
      $region32: #{tpu_custom_call.1} parent=5 // pred_fallthru
        _
      %p1673 = scmp.le.s32.totalorder 2, %s17
      // Predicated region
      $region49: #{tpu_custom_call.1} parent=5 // pred_check
        %p1674 = pneg %p1673
      $region50: #{tpu_custom_call.1} parent=5 // pred_check_branch
        %1676 = sbr.rel (%p1674) target = $region52
      $region51: #{tpu_custom_call.1} parent=5 // pred_region
        %s1677 = ssub.s32 %s17, 2
        // Predicated region
        $region53: #{tpu_custom_call.1} parent=51 // pred_check
          %p1678 = pneg %p114
        $region54: #{tpu_custom_call.1} parent=51 // pred_check_branch
          %1680 = sbr.rel (%p1678) target = $region56
        $region55: #{tpu_custom_call.1} parent=51 // pred_region
          %s1681 = sand.u32 %s99, 1
          %s1682 = scalar_lea.sflag [#allocation4], %s1681
          %s1683 = sand.u32 %s99, 1
          %s1684 = smul.addr %s1683, 16
          %s1685 = scalar_lea.vmem [#allocation9], %s1684
          %1686 = dma.done %s1682, 256
        $region56: #{tpu_custom_call.1} parent=51 // pred_fallthru
          _
      $region52: #{tpu_custom_call.1} parent=5 // pred_fallthru
        _
    $region6: #{tpu_custom_call.1} parent=1 // loop_footer
      %s21 = sadd.s32 1, %s17
    $region7: #{tpu_custom_call.1} parent=1 // loop_footer_branch
      %16 = sbr.rel target = $region3
    $region8: #{tpu_custom_call.1} parent=1 // loop_exit
      _
    %1687 = vsyncpa [#allocation3], 1
    %s1688 = scalar_lea.sflag [#allocation3], 1
    %1689 = vsyncpa %s1688, 1
    %1690 = vsyncpa [#allocation8], 1
    %s1691 = scalar_lea.sflag [#allocation8], 1
    %1692 = vsyncpa %s1691, 1
    %1693 = vsyncpa [#allocation4], 1
    %s1694 = scalar_lea.sflag [#allocation4], 1
    %1695 = vsyncpa %s1694, 1
    %1696 = vsyncpa [#allocation5], 1
    %s1697 = scalar_lea.sflag [#allocation5], 1
    %1698 = vsyncpa %s1697, 1

</llo_original>
